<compile_context>
chip_gen: v7x
topology: tpu7x:2x2x1
jax: 0.10.0
libtpu: 0.0.40
codegen_flags: <defaults>
</compile_context>

<pallas_src>
import functools

import jax
import jax.numpy as jnp
from jax.experimental import pallas as pl
from jax.experimental.pallas import tpu as pltpu


def _round_up(x, m):
    return (x + m - 1) // m * m


def _link_predictor_kernel(xi_ref, xj_ref, p_ref, o_ref, *,
                           c_in, hid, r_w1, r_w2, r_b1, r_b2, r_w3, r_b3):
    # Elementwise product in the streaming dtype: bf16 stays native on v6e/v7x
    # (bf16 VALU + bf16 MXU input); f32 inputs are exact.
    x = xi_ref[...] * xj_ref[...]                           # (tm, c_in)

    # Layer 1 on the MXU with f32 accumulation. Cast the resident weight tile
    # to the streaming dtype (no-op for f32) so a bf16 LHS gets a native bf16
    # matmul instead of forcing an f32 upcast of the whole activation tile.
    w1 = p_ref[r_w1:r_w1 + c_in, :].astype(x.dtype)         # (c_in, hid)
    h = jnp.dot(x, w1, preferred_element_type=jnp.float32)
    h = jnp.maximum(h + p_ref[r_b1:r_b1 + 1, :], 0.0)       # bias + ReLU; dropout(eval)=id

    # Layer 2 stays in f32 (h is already the f32 accumulator output).
    h = jnp.dot(h, p_ref[r_w2:r_w2 + hid, :], preferred_element_type=jnp.float32)
    h = jnp.maximum(h + p_ref[r_b2:r_b2 + 1, :], 0.0)

    # Final [hid -> 1] layer as a (tm,hid)x(hid,1) MXU matmul: the result lands
    # directly in the (tm, 1) output layout — no (tm,) -> (1, tm) XLU relayout,
    # no wrapper-side reshape.
    w3 = p_ref[r_w3:r_w3 + hid, 0:1]                        # (hid, 1) column
    logits = jnp.dot(h, w3, preferred_element_type=jnp.float32)
    logits = logits + p_ref[r_b3:r_b3 + 1, 0:1]             # (1, 1) broadcast add
    o_ref[...] = jax.nn.sigmoid(logits).astype(o_ref.dtype)


def _pack_params(params):
    """params = (w1, b1, w2, b2, w3, b3); weights are [fan_in, fan_out].

    Everything (including the b3 scalar) is packed into a single small f32
    block so the kernel has exactly one grid-constant parameter input.
    Row layout (8-row / sublane aligned starts):
        [r_w1 : r_w1+c_in, :]  W1 (c_in, hid)
        [r_w2 : r_w2+hid , :]  W2 (hid, hid)
        [r_b1            , :]  b1
        [r_b2            , :]  b2
        [r_w3 : r_w3+hid , 0]  W3 as a column (== torch lin3.weight[0])
        [r_b3            , 0]  b3 scalar
    """
    w1, b1, w2, b2, w3, b3 = params
    c_in, hid = w1.shape
    assert w2.shape == (hid, hid)
    assert w3.shape == (hid, 1), "kernel assumes out_channels == 1"

    r_w1 = 0
    r_w2 = _round_up(c_in, 8)
    r_b1 = _round_up(r_w2 + hid, 8)
    r_b2 = r_b1 + 8
    r_w3 = r_b2 + 8
    r_b3 = _round_up(r_w3 + hid, 8)
    rows = r_b3 + 8

    p = jnp.zeros((rows, hid), jnp.float32)
    p = p.at[r_w1:r_w1 + c_in, :].set(w1.astype(jnp.float32))
    p = p.at[r_w2:r_w2 + hid, :].set(w2.astype(jnp.float32))
    p = p.at[r_b1, :].set(b1.reshape(hid).astype(jnp.float32))
    p = p.at[r_b2, :].set(b2.reshape(hid).astype(jnp.float32))
    p = p.at[r_w3:r_w3 + hid, 0].set(w3.reshape(hid).astype(jnp.float32))
    p = p.at[r_b3, 0].set(jnp.asarray(b3, jnp.float32).reshape(()))

    offs = dict(c_in=c_in, hid=hid, r_w1=r_w1, r_w2=r_w2,
                r_b1=r_b1, r_b2=r_b2, r_w3=r_w3, r_b3=r_b3)
    return p, offs


def _pick_tm(n, c_in, itemsize):
    """Row-tile size: as large as comfortably fits VMEM (mem-bound => bigger
    tiles get closer to the HBM roofline), but keep the grid length >= 2 so the
    'parallel' axis still shards across both v7x TensorCores."""
    # Keep the double-buffered activation working set (2 inputs x 2 buffers)
    # under ~8 MiB -> well inside the 16 MiB default scoped-VMEM limit on v5e.
    vmem_budget = 8 * 1024 * 1024
    tm_cap = max(128, vmem_budget // (2 * 2 * c_in * itemsize) // 128 * 128)
    n128 = _round_up(n, 128)
    tm = min(8192, tm_cap)
    while tm > 128 and 2 * tm > n128:
        tm //= 2
    return max(tm, 128)


def link_predictor_forward(x_i, x_j, params, *, tm=None):
    """Fused LinkPredictor forward (eval mode). Returns sigmoid probs, (N, 1)."""
    assert x_i.shape == x_j.shape and x_i.ndim == 2
    assert x_i.dtype == x_j.dtype
    n, c_in = x_i.shape

    p, offs = _pack_params(params)
    assert c_in == offs["c_in"]

    if tm is None:
        tm = _pick_tm(n, c_in, jnp.dtype(x_i.dtype).itemsize)
    grid = (pl.cdiv(n, tm),)   # ragged last block: OOB reads padded, OOB writes dropped

    kernel = functools.partial(_link_predictor_kernel, **offs)

    out = pl.pallas_call(
        kernel,
        out_shape=jax.ShapeDtypeStruct((n, 1), jnp.float32),
        grid=grid,
        in_specs=[
            pl.BlockSpec((tm, c_in), lambda i: (i, 0)),   # x_i tile (streamed as-is)
            pl.BlockSpec((tm, c_in), lambda i: (i, 0)),   # x_j tile (streamed as-is)
            pl.BlockSpec(p.shape, lambda i: (0, 0)),      # packed W/b block (grid-constant)
        ],
        out_specs=pl.BlockSpec((tm, 1), lambda i: (i, 0)),
        compiler_params=pltpu.CompilerParams(
            dimension_semantics=("parallel",)),
    )(x_i, x_j, p)

    return out


def init_params(key, in_channels, hidden_channels, out_channels, num_layers):
    """torch.nn.Linear-style init; weights returned already as [fan_in, fan_out]."""
    assert num_layers >= 2
    dims = ([(in_channels, hidden_channels)]
            + [(hidden_channels, hidden_channels)] * (num_layers - 2)
            + [(hidden_channels, out_channels)])
    params = []
    for fan_in, fan_out in dims:
        key, kw, kb = jax.random.split(key, 3)
        bound = 1.0 / jnp.sqrt(fan_in)
        w = jax.random.uniform(kw, (fan_in, fan_out), jnp.float32, -bound, bound)
        b = jax.random.uniform(kb, (fan_out,), jnp.float32, -bound, bound)
        params += [w, b]
    return tuple(params)


def reference_forward(x_i, x_j, params):
    w1, b1, w2, b2, w3, b3 = params
    x = x_i * x_j
    x = jnp.maximum(x @ w1 + b1, 0.0)
    x = jnp.maximum(x @ w2 + b2, 0.0)
    return jax.nn.sigmoid(x @ w3 + b3)


if __name__ == "__main__":
    in_channels = 32
    hidden_channels = 32
    out_channels = 1
    num_layers = 3
    N = 512  # two 256-row tiles -> both v7x TensorCores get work

    key = jax.random.PRNGKey(0)
    key, k_i, k_j = jax.random.split(key, 3)
    x_i = jax.random.normal(k_i, (N, in_channels), jnp.float32)
    x_j = jax.random.normal(k_j, (N, in_channels), jnp.float32)

    params = init_params(key, in_channels, hidden_channels, out_channels, num_layers)
    ref = reference_forward(x_i, x_j, params)

    # f32 streaming (exact path).
    out = jax.block_until_ready(link_predictor_forward(x_i, x_j, params))
    assert out.shape == (N, out_channels)
    assert jnp.allclose(out, ref, atol=1e-5, rtol=1e-5), "f32 kernel mismatch vs reference"

    # Ragged N (tile does not divide N): cdiv grid, no wrapper-side padding pass.
    n_odd = 300
    out_odd = jax.block_until_ready(
        link_predictor_forward(x_i[:n_odd], x_j[:n_odd], params))
    assert out_odd.shape == (n_odd, out_channels)
    assert jnp.allclose(out_odd, ref[:n_odd], atol=1e-5, rtol=1e-5), "ragged-N mismatch"

    # bf16 streaming: inputs already bf16 (no wrapper-side cast pass); product
    # and first matmul stay native bf16 on v6e/v7x.
    out_bf16 = jax.block_until_ready(
        link_predictor_forward(x_i.astype(jnp.bfloat16),
                               x_j.astype(jnp.bfloat16), params))
    assert out_bf16.shape == (N, out_channels)
    assert jnp.allclose(out_bf16, ref, atol=5e-2), "bf16 kernel mismatch vs reference"

    print("KERNEL_OK")
</pallas_src>

<mosaic_0001>
module attributes {stable_mosaic.version = 11 : i64} {
  func.func @_link_predictor_kernel(%arg0: i32, %arg1: memref<256x32xf32, #tpu.memory_space<vmem>>, %arg2: memref<256x32xf32, #tpu.memory_space<vmem>>, %arg3: memref<120x32xf32, #tpu.memory_space<vmem>>, %arg4: memref<256x1xf32, #tpu.memory_space<vmem>>) attributes {dimension_semantics = [#tpu.dimension_semantics<parallel>], iteration_bounds = array<i64: 2>, scalar_prefetch = 0 : i64, scratch_operands = 0 : i64, tpu.core_type = #tpu.core_type<tc>, window_params = [{transform_indices = @transform_0, window_bounds = array<i64: 256, 32>}, {transform_indices = @transform_1, window_bounds = array<i64: 256, 32>}, {pipeline_mode = #tpu.pipeline_mode<synchronous>, transform_indices = @transform_2, window_bounds = array<i64: 120, 32>}, {transform_indices = @transform_3, window_bounds = array<i64: 256, 1>}]} {
    %c0 = arith.constant 0 : index
    %c0_0 = arith.constant 0 : index
    %0 = vector.load %arg1[%c0, %c0_0] : memref<256x32xf32, #tpu.memory_space<vmem>>, vector<256x32xf32>
    %c0_1 = arith.constant 0 : index
    %c0_2 = arith.constant 0 : index
    %1 = vector.load %arg2[%c0_1, %c0_2] : memref<256x32xf32, #tpu.memory_space<vmem>>, vector<256x32xf32>
    %2 = arith.mulf %0, %1 : vector<256x32xf32>
    %c0_3 = arith.constant 0 : index
    %c0_4 = arith.constant 0 : index
    %3 = vector.load %arg3[%c0_3, %c0_4] : memref<120x32xf32, #tpu.memory_space<vmem>>, vector<32x32xf32>
    %cst = arith.constant dense<0.000000e+00> : vector<256x32xf32>
    %4 = tpu.matmul %2, %3, %cst {dimension_numbers = #tpu.dot_dimension_numbers<[1], [0], [0], [1], [0, 0, 1, 1], [], []>} : vector<256x32xf32>, vector<32x32xf32>, vector<256x32xf32> -> vector<256x32xf32>
    %c64 = arith.constant 64 : index
    %c0_5 = arith.constant 0 : index
    %5 = vector.load %arg3[%c64, %c0_5] : memref<120x32xf32, #tpu.memory_space<vmem>>, vector<1x32xf32>
    %6 = vector.broadcast %5 : vector<1x32xf32> to vector<256x32xf32>
    %7 = arith.addf %4, %6 : vector<256x32xf32>
    %cst_6 = arith.constant 0.000000e+00 : f32
    %8 = vector.broadcast %cst_6 : f32 to vector<256x32xf32>
    %9 = arith.maximumf %7, %8 : vector<256x32xf32>
    %c32 = arith.constant 32 : index
    %c0_7 = arith.constant 0 : index
    %10 = vector.load %arg3[%c32, %c0_7] : memref<120x32xf32, #tpu.memory_space<vmem>>, vector<32x32xf32>
    %cst_8 = arith.constant dense<0.000000e+00> : vector<256x32xf32>
    %11 = tpu.matmul %9, %10, %cst_8 {dimension_numbers = #tpu.dot_dimension_numbers<[1], [0], [0], [1], [0, 0, 1, 1], [], []>} : vector<256x32xf32>, vector<32x32xf32>, vector<256x32xf32> -> vector<256x32xf32>
    %c72 = arith.constant 72 : index
    %c0_9 = arith.constant 0 : index
    %12 = vector.load %arg3[%c72, %c0_9] : memref<120x32xf32, #tpu.memory_space<vmem>>, vector<1x32xf32>
    %13 = vector.broadcast %12 : vector<1x32xf32> to vector<256x32xf32>
    %14 = arith.addf %11, %13 : vector<256x32xf32>
    %cst_10 = arith.constant 0.000000e+00 : f32
    %15 = vector.broadcast %cst_10 : f32 to vector<256x32xf32>
    %16 = arith.maximumf %14, %15 : vector<256x32xf32>
    %c80 = arith.constant 80 : index
    %c0_11 = arith.constant 0 : index
    %17 = vector.load %arg3[%c80, %c0_11] : memref<120x32xf32, #tpu.memory_space<vmem>>, vector<32x1xf32>
    %cst_12 = arith.constant dense<0.000000e+00> : vector<256x1xf32>
    %18 = tpu.matmul %16, %17, %cst_12 {dimension_numbers = #tpu.dot_dimension_numbers<[1], [0], [0], [1], [0, 0, 1, 1], [], []>} : vector<256x32xf32>, vector<32x1xf32>, vector<256x1xf32> -> vector<256x1xf32>
    %c112 = arith.constant 112 : index
    %c0_13 = arith.constant 0 : index
    %19 = vector.load %arg3[%c112, %c0_13] : memref<120x32xf32, #tpu.memory_space<vmem>>, vector<1x1xf32>
    %20 = vector.broadcast %19 : vector<1x1xf32> to vector<256x1xf32>
    %21 = arith.addf %18, %20 : vector<256x1xf32>
    %22 = arith.negf %21 : vector<256x1xf32>
    %23 = math.exp %22 : vector<256x1xf32>
    %cst_14 = arith.constant 1.000000e+00 : f32
    %24 = vector.broadcast %cst_14 : f32 to vector<256x1xf32>
    %25 = arith.addf %24, %23 : vector<256x1xf32>
    %26 = arith.divf %24, %25 : vector<256x1xf32>
    %c0_15 = arith.constant 0 : index
    %c0_16 = arith.constant 0 : index
    %27 = vector.load %arg4[%c0_15, %c0_16] : memref<256x1xf32, #tpu.memory_space<vmem>>, vector<256x1xf32>
    tpu.vector_store %arg4[%c0_15, %c0_16], %26 {strides = array<i32>} : memref<256x1xf32, #tpu.memory_space<vmem>>, vector<256x1xf32>,
    return
  }
  func.func @transform_0(%arg0: i32) -> (i32, i32) {
    %c0_i32 = arith.constant 0 : i32
    %c0_i32_0 = arith.constant 0 : i32
    return %arg0, %c0_i32 : i32, i32
  }
  func.func @transform_1(%arg0: i32) -> (i32, i32) {
    %c0_i32 = arith.constant 0 : i32
    %c0_i32_0 = arith.constant 0 : i32
    return %arg0, %c0_i32 : i32, i32
  }
  func.func @transform_2(%arg0: i32) -> (i32, i32) {
    %c0_i32 = arith.constant 0 : i32
    %c0_i32_0 = arith.constant 0 : i32
    %c0_i32_1 = arith.constant 0 : i32
    return %c0_i32, %c0_i32_0 : i32, i32
  }
  func.func @transform_3(%arg0: i32) -> (i32, i32) {
    %c0_i32 = arith.constant 0 : i32
    %c0_i32_0 = arith.constant 0 : i32
    return %arg0, %c0_i32 : i32, i32
  }
}

</mosaic_0001>

<llo_original>
// kernel: tpu_custom_call.1
$region0: #{tpu_custom_call.1}
  #allocation0 [shape = 'u32[]', space=smem, size = 0x4, offset = 0x4, fixed_abs, tag = 'smem constant byte address 0x4 - core index']
  #allocation1 [shape = 'u32[144,128]{1,0:T(1,128)}', space=vmem, size = 0x12000, scoped, tag = 'internal scratch']
  %s0 = inlined_call_operand.vmem [shape: f32[512,32], index: 0, kind: input, shape index: {}]
  %s1 = inlined_call_operand.vmem [shape: f32[512,32], index: 1, kind: input, shape index: {}]
  %s2 = inlined_call_operand.vmem [shape: f32[120,32], index: 2, kind: input, shape index: {}]
  %s3 = inlined_call_operand.vmem [shape: f32[512,1], index: 3, kind: output, shape index: {}]
  %s4 = sld [smem:[#allocation0]]
  $region45: #{tpu_custom_call.1} parent=0
    _
  %s6 = ssub.s32 1, %s4
  %s7 = scalar_select 0, %s6, %s4
  loop: start=0, step=1, limit=4
  $region2: #{tpu_custom_call.1} parent=0 // loop_pre_header
    _
  $region3: #{tpu_custom_call.1} parent=0 // loop_header
    %s9 = sphi 0, %s13
    %p10 = scmp.ge.s32.totalorder %s9, 4
    %s19 = sphi 0, %s21
    %s22 = sphi 0, %s19
    %s23 = sphi 0, %s22
    %s39 = sphi 0, %s23
    %s45 = sphi 0, %s47
    %s48 = sphi 0, %s45
    %s49 = sphi 0, %s48
    %s65 = sphi 0, %s49
    %s69 = sphi 0, %s69
    %s71 = sphi 0, %s69
    %s72 = sphi 0, %s71
    %s86 = sphi 0, %s72
    %s92 = sphi 0, %s94
    %s95 = sphi 0, %s92
    %s96 = sphi 0, %s95
    %s112 = sphi 0, %s96
  $region4: #{tpu_custom_call.1} parent=0 // loop_header_branch
    %12 = sbr.rel (%p10) target = $region8
  $region5: #{tpu_custom_call.1} parent=0 // loop_body
    %s14 = ssub.s32 %s9, 1
    %s15 = ssub.s32 %s9, 2
    %s16 = sadd.s32 %s9, 1
    %s17 = ssub.s32 %s9, %s16
    %p18 = scmp.eq.s32.totalorder %s17, 0
    %s20 = sadd.s32 %s19, 1
    %s21 = scalar_select %p18, %s19, %s20
    %p24 = pneg %p18
    %p25 = scmp.eq.s32.totalorder %s9, 1
    %p26 = por %p24, %p25
    %p27 = scmp.ne.s32.totalorder %s19, %s22
    %p28 = scmp.eq.s32.totalorder %s9, 0
    %p29 = por %p27, %p28
    %p30 = scmp.ne.s32.totalorder %s19, %s22
    %p31 = scmp.eq.s32.totalorder %s14, 1
    %p32 = por %p30, %p31
    %p33 = scmp.ne.s32.totalorder %s22, %s23
    %p34 = scmp.eq.s32.totalorder %s14, 0
    %p35 = por %p33, %p34
    %p36 = scmp.ne.s32.totalorder %s22, %s23
    %p37 = scmp.eq.s32.totalorder %s15, 1
    %p38 = por %p36, %p37
    %p40 = scmp.ne.s32.totalorder %s23, %s39
    %p41 = scmp.eq.s32.totalorder %s15, 0
    %p42 = por %p40, %p41
    %s43 = ssub.s32 %s9, %s16
    %p44 = scmp.eq.s32.totalorder %s43, 0
    %s46 = sadd.s32 %s45, 1
    %s47 = scalar_select %p44, %s45, %s46
    %p50 = pneg %p44
    %p51 = scmp.eq.s32.totalorder %s9, 1
    %p52 = por %p50, %p51
    %p53 = scmp.ne.s32.totalorder %s45, %s48
    %p54 = scmp.eq.s32.totalorder %s9, 0
    %p55 = por %p53, %p54
    %p56 = scmp.ne.s32.totalorder %s45, %s48
    %p57 = scmp.eq.s32.totalorder %s14, 1
    %p58 = por %p56, %p57
    %p59 = scmp.ne.s32.totalorder %s48, %s49
    %p60 = scmp.eq.s32.totalorder %s14, 0
    %p61 = por %p59, %p60
    %p62 = scmp.ne.s32.totalorder %s48, %s49
    %p63 = scmp.eq.s32.totalorder %s15, 1
    %p64 = por %p62, %p63
    %p66 = scmp.ne.s32.totalorder %s49, %s65
    %p67 = scmp.eq.s32.totalorder %s15, 0
    %p68 = por %p66, %p67
    %s70 = sadd.s32 %s69, 1
    %p73 = scmp.eq.s32.totalorder %s9, 1
    %p74 = scmp.ne.s32.totalorder %s69, %s71
    %p75 = scmp.eq.s32.totalorder %s9, 0
    %p76 = por %p74, %p75
    %p77 = scmp.ne.s32.totalorder %s69, %s71
    %p78 = scmp.eq.s32.totalorder %s14, 1
    %p79 = por %p77, %p78
    %p80 = scmp.ne.s32.totalorder %s71, %s72
    %p81 = scmp.eq.s32.totalorder %s14, 0
    %p82 = por %p80, %p81
    %p83 = scmp.ne.s32.totalorder %s71, %s72
    %p84 = scmp.eq.s32.totalorder %s15, 1
    %p85 = por %p83, %p84
    %p87 = scmp.ne.s32.totalorder %s72, %s86
    %p88 = scmp.eq.s32.totalorder %s15, 0
    %p89 = por %p87, %p88
    %s90 = ssub.s32 %s9, %s16
    %p91 = scmp.eq.s32.totalorder %s90, 0
    %s93 = sadd.s32 %s92, 1
    %s94 = scalar_select %p91, %s92, %s93
    %p97 = pneg %p91
    %p98 = scmp.eq.s32.totalorder %s9, 1
    %p99 = por %p97, %p98
    %p100 = scmp.ne.s32.totalorder %s92, %s95
    %p101 = scmp.eq.s32.totalorder %s9, 0
    %p102 = por %p100, %p101
    %p103 = scmp.ne.s32.totalorder %s92, %s95
    %p104 = scmp.eq.s32.totalorder %s14, 1
    %p105 = por %p103, %p104
    %p106 = scmp.ne.s32.totalorder %s95, %s96
    %p107 = scmp.eq.s32.totalorder %s14, 0
    %p108 = por %p106, %p107
    %p109 = scmp.ne.s32.totalorder %s95, %s96
    %p110 = scmp.eq.s32.totalorder %s15, 1
    %p111 = por %p109, %p110
    %p113 = scmp.ne.s32.totalorder %s96, %s112
    %p114 = scmp.eq.s32.totalorder %s15, 0
    %p115 = por %p113, %p114
    %p116 = scmp.le.s32.totalorder 1, %s9
    %p117 = scmp.lt.s32.totalorder %s9, 3
    %p118 = pnand %p116, %p117
    %p119 = pneg %p118
    // Predicated region
    $region9: #{tpu_custom_call.1} parent=5 // pred_check
      _
    $region10: #{tpu_custom_call.1} parent=5 // pred_check_branch
      %121 = sbr.rel (%p118) target = $region12
    $region11: #{tpu_custom_call.1} parent=5 // pred_region
      %s122 = ssub.s32 %s9, 1
      // Predicated region
      $region13: #{tpu_custom_call.1} parent=11 // pred_check
        %p123 = pneg %p82
      $region14: #{tpu_custom_call.1} parent=11 // pred_check_branch
        %125 = sbr.rel (%p123) target = $region16
      $region15: #{tpu_custom_call.1} parent=11 // pred_region
        _
      $region16: #{tpu_custom_call.1} parent=11 // pred_fallthru
        _
    $region12: #{tpu_custom_call.1} parent=5 // pred_fallthru
      _
    %p126 = scmp.lt.s32.totalorder %s9, 2
    // Predicated region
    $region17: #{tpu_custom_call.1} parent=5 // pred_check
      %p127 = pneg %p126
    $region18: #{tpu_custom_call.1} parent=5 // pred_check_branch
      %129 = sbr.rel (%p127) target = $region20
    $region19: #{tpu_custom_call.1} parent=5 // pred_region
      // Predicated region
      $region21: #{tpu_custom_call.1} parent=19 // pred_check
        %p130 = pneg %p29
      $region22: #{tpu_custom_call.1} parent=19 // pred_check_branch
        %132 = sbr.rel (%p130) target = $region24
      $region23: #{tpu_custom_call.1} parent=19 // pred_region
        %s133 = smul.u32 32, %s9
        %p134 = scmp.lt.s32.totalorder %s133, 63
        %s135 = scalar_select %p134, %s133, 63
        %s136 = smul.addr %s135, 8
        %s137 = scalar_lea.vmem %s0, %s136
        %s138 = smul.u32 32, %s9
      $region24: #{tpu_custom_call.1} parent=19 // pred_fallthru
        _
      // Predicated region
      $region25: #{tpu_custom_call.1} parent=19 // pred_check
        %p139 = pneg %p55
      $region26: #{tpu_custom_call.1} parent=19 // pred_check_branch
        %141 = sbr.rel (%p139) target = $region28
      $region27: #{tpu_custom_call.1} parent=19 // pred_region
        %s142 = smul.u32 32, %s9
        %p143 = scmp.lt.s32.totalorder %s142, 63
        %s144 = scalar_select %p143, %s142, 63
        %s145 = smul.addr %s144, 8
        %s146 = scalar_lea.vmem %s1, %s145
        %s147 = smul.u32 32, %s9
      $region28: #{tpu_custom_call.1} parent=19 // pred_fallthru
        _
    $region20: #{tpu_custom_call.1} parent=5 // pred_fallthru
      _
    %p148 = scmp.le.s32.totalorder 1, %s9
    %p149 = scmp.lt.s32.totalorder %s9, 3
    %p150 = pnand %p148, %p149
    %p151 = pneg %p150
    // Predicated region
    $region29: #{tpu_custom_call.1} parent=5 // pred_check
      _
    $region30: #{tpu_custom_call.1} parent=5 // pred_check_branch
      %153 = sbr.rel (%p150) target = $region32
    $region31: #{tpu_custom_call.1} parent=5 // pred_region
      %s154 = ssub.s32 %s9, 1
      %s155 = smul.u32 32, %s14
      %p156 = scmp.lt.s32.totalorder %s155, 63
      %s157 = scalar_select %p156, %s155, 63
      %s158 = smul.addr %s157, 8
      %s159 = scalar_lea.vmem %s0, %s158
      %p160 = pneg %p35
      %p161 = pneg %p32
      %s162 = smul.u32 32, %s14
      %p163 = scmp.lt.s32.totalorder %s162, 63
      %s164 = scalar_select %p163, %s162, 63
      %s165 = smul.addr %s164, 8
      %s166 = scalar_lea.vmem %s1, %s165
      %p167 = pneg %p61
      %p168 = pneg %p58
      %p169 = pneg %p82
      %p170 = pneg %p79
      %p171 = pneg %p108
      %p172 = pneg %p105
      %s173 = smul.u32 32, %s14
      %p174 = scmp.lt.s32.totalorder %s173, 63
      %s175 = scalar_select %p174, %s173, 63
      %s176 = smul.addr %s175, 8
      %s177 = scalar_lea.vmem %s3, %s176
      %s178 = smul.u32 32, %s14
      %p179 = scmp.lt.s32.totalorder %s178, 63
      %s180 = scalar_select %p179, %s178, 63
      %s181 = smul.addr %s180, 8
      %s182 = scalar_lea.vmem %s0, %s181
      %s183 = smul.u32 32, %s14
      %s184 = smul.u32 32, %s14
      %p185 = scmp.lt.s32.totalorder %s184, 63
      %s186 = scalar_select %p185, %s184, 63
      %s187 = smul.addr %s186, 8
      %s188 = scalar_lea.vmem %s1, %s187
      %s189 = smul.u32 32, %s14
      %s190 = smul.u32 32, %s14
      %p191 = scmp.lt.s32.totalorder %s190, 63
      %s192 = scalar_select %p191, %s190, 63
      %s193 = smul.addr %s192, 8
      %s194 = scalar_lea.vmem %s3, %s193
      %s195 = smul.u32 32, %s14
      %v196 = vld [vmem:[%s182] sm:$0xff]
      %v197 = vld [vmem:[%s182 + $0x8] sm:$0xff]
      %v198 = vld [vmem:[%s182 + $0x10] sm:$0xff]
      %v199 = vld [vmem:[%s182 + $0x18] sm:$0xff]
      %v200 = vld [vmem:[%s182 + $0x20] sm:$0xff]
      %v201 = vld [vmem:[%s182 + $0x28] sm:$0xff]
      %v202 = vld [vmem:[%s182 + $0x30] sm:$0xff]
      %v203 = vld [vmem:[%s182 + $0x38] sm:$0xff]
      %v204 = vld [vmem:[%s182 + $0x40] sm:$0xff]
      %v205 = vld [vmem:[%s182 + $0x48] sm:$0xff]
      %v206 = vld [vmem:[%s182 + $0x50] sm:$0xff]
      %v207 = vld [vmem:[%s182 + $0x58] sm:$0xff]
      %v208 = vld [vmem:[%s182 + $0x60] sm:$0xff]
      %v209 = vld [vmem:[%s182 + $0x68] sm:$0xff]
      %v210 = vld [vmem:[%s182 + $0x70] sm:$0xff]
      %v211 = vld [vmem:[%s182 + $0x78] sm:$0xff]
      %v212 = vld [vmem:[%s182 + $0x80] sm:$0xff]
      %v213 = vld [vmem:[%s182 + $0x88] sm:$0xff]
      %v214 = vld [vmem:[%s182 + $0x90] sm:$0xff]
      %v215 = vld [vmem:[%s182 + $0x98] sm:$0xff]
      %v216 = vld [vmem:[%s182 + $0xa0] sm:$0xff]
      %v217 = vld [vmem:[%s182 + $0xa8] sm:$0xff]
      %v218 = vld [vmem:[%s182 + $0xb0] sm:$0xff]
      %v219 = vld [vmem:[%s182 + $0xb8] sm:$0xff]
      %v220 = vld [vmem:[%s182 + $0xc0] sm:$0xff]
      %v221 = vld [vmem:[%s182 + $0xc8] sm:$0xff]
      %v222 = vld [vmem:[%s182 + $0xd0] sm:$0xff]
      %v223 = vld [vmem:[%s182 + $0xd8] sm:$0xff]
      %v224 = vld [vmem:[%s182 + $0xe0] sm:$0xff]
      %v225 = vld [vmem:[%s182 + $0xe8] sm:$0xff]
      %v226 = vld [vmem:[%s182 + $0xf0] sm:$0xff]
      %v227 = vld [vmem:[%s182 + $0xf8] sm:$0xff]
      %v228 = vld [vmem:[%s188] sm:$0xff]
      %v229 = vld [vmem:[%s188 + $0x8] sm:$0xff]
      %v230 = vld [vmem:[%s188 + $0x10] sm:$0xff]
      %v231 = vld [vmem:[%s188 + $0x18] sm:$0xff]
      %v232 = vld [vmem:[%s188 + $0x20] sm:$0xff]
      %v233 = vld [vmem:[%s188 + $0x28] sm:$0xff]
      %v234 = vld [vmem:[%s188 + $0x30] sm:$0xff]
      %v235 = vld [vmem:[%s188 + $0x38] sm:$0xff]
      %v236 = vld [vmem:[%s188 + $0x40] sm:$0xff]
      %v237 = vld [vmem:[%s188 + $0x48] sm:$0xff]
      %v238 = vld [vmem:[%s188 + $0x50] sm:$0xff]
      %v239 = vld [vmem:[%s188 + $0x58] sm:$0xff]
      %v240 = vld [vmem:[%s188 + $0x60] sm:$0xff]
      %v241 = vld [vmem:[%s188 + $0x68] sm:$0xff]
      %v242 = vld [vmem:[%s188 + $0x70] sm:$0xff]
      %v243 = vld [vmem:[%s188 + $0x78] sm:$0xff]
      %v244 = vld [vmem:[%s188 + $0x80] sm:$0xff]
      %v245 = vld [vmem:[%s188 + $0x88] sm:$0xff]
      %v246 = vld [vmem:[%s188 + $0x90] sm:$0xff]
      %v247 = vld [vmem:[%s188 + $0x98] sm:$0xff]
      %v248 = vld [vmem:[%s188 + $0xa0] sm:$0xff]
      %v249 = vld [vmem:[%s188 + $0xa8] sm:$0xff]
      %v250 = vld [vmem:[%s188 + $0xb0] sm:$0xff]
      %v251 = vld [vmem:[%s188 + $0xb8] sm:$0xff]
      %v252 = vld [vmem:[%s188 + $0xc0] sm:$0xff]
      %v253 = vld [vmem:[%s188 + $0xc8] sm:$0xff]
      %v254 = vld [vmem:[%s188 + $0xd0] sm:$0xff]
      %v255 = vld [vmem:[%s188 + $0xd8] sm:$0xff]
      %v256 = vld [vmem:[%s188 + $0xe0] sm:$0xff]
      %v257 = vld [vmem:[%s188 + $0xe8] sm:$0xff]
      %v258 = vld [vmem:[%s188 + $0xf0] sm:$0xff]
      %v259 = vld [vmem:[%s188 + $0xf8] sm:$0xff]
      %v260 = vmul.f32 %v196, %v228
      %v261 = vmul.f32 %v197, %v229
      %v262 = vmul.f32 %v198, %v230
      %v263 = vmul.f32 %v199, %v231
      %v264 = vmul.f32 %v200, %v232
      %v265 = vmul.f32 %v201, %v233
      %v266 = vmul.f32 %v202, %v234
      %v267 = vmul.f32 %v203, %v235
      %v268 = vmul.f32 %v204, %v236
      %v269 = vmul.f32 %v205, %v237
      %v270 = vmul.f32 %v206, %v238
      %v271 = vmul.f32 %v207, %v239
      %v272 = vmul.f32 %v208, %v240
      %v273 = vmul.f32 %v209, %v241
      %v274 = vmul.f32 %v210, %v242
      %v275 = vmul.f32 %v211, %v243
      %v276 = vmul.f32 %v212, %v244
      %v277 = vmul.f32 %v213, %v245
      %v278 = vmul.f32 %v214, %v246
      %v279 = vmul.f32 %v215, %v247
      %v280 = vmul.f32 %v216, %v248
      %v281 = vmul.f32 %v217, %v249
      %v282 = vmul.f32 %v218, %v250
      %v283 = vmul.f32 %v219, %v251
      %v284 = vmul.f32 %v220, %v252
      %v285 = vmul.f32 %v221, %v253
      %v286 = vmul.f32 %v222, %v254
      %v287 = vmul.f32 %v223, %v255
      %v288 = vmul.f32 %v224, %v256
      %v289 = vmul.f32 %v225, %v257
      %v290 = vmul.f32 %v226, %v258
      %v291 = vmul.f32 %v227, %v259
      %v292 = vld [vmem:[%s2] sm:$0xff]
      %v293 = vld [vmem:[%s2 + $0x8] sm:$0xff]
      %v294 = vld [vmem:[%s2 + $0x10] sm:$0xff]
      %v295 = vld [vmem:[%s2 + $0x18] sm:$0xff]
      %v296 = vld [vmem:[%s2 + $0x40] sm:$0x1]
      %v297 = vlaneseq
      %v298 = vshrl.u32 %v297, 7
      %v299 = vsub.s32 0, %v298
      %v300 = vrot.slane %v296, %v299
      %vm301 = vcmask 261120
      %v303 = vsel %vm301, %v260, 0
      %v306 = vsel %vm301, %v261, 0
      %v309 = vsel %vm301, %v262, 0
      %v312 = vsel %vm301, %v263, 0
      %v315 = vsel %vm301, %v264, 0
      %v318 = vsel %vm301, %v265, 0
      %v321 = vsel %vm301, %v266, 0
      %v324 = vsel %vm301, %v267, 0
      %v327 = vsel %vm301, %v268, 0
      %v330 = vsel %vm301, %v269, 0
      %v333 = vsel %vm301, %v270, 0
      %v336 = vsel %vm301, %v271, 0
      %v339 = vsel %vm301, %v272, 0
      %v342 = vsel %vm301, %v273, 0
      %v345 = vsel %vm301, %v274, 0
      %v348 = vsel %vm301, %v275, 0
      %v351 = vsel %vm301, %v276, 0
      %v354 = vsel %vm301, %v277, 0
      %v357 = vsel %vm301, %v278, 0
      %v360 = vsel %vm301, %v279, 0
      %v363 = vsel %vm301, %v280, 0
      %v366 = vsel %vm301, %v281, 0
      %v369 = vsel %vm301, %v282, 0
      %v372 = vsel %vm301, %v283, 0
      %v375 = vsel %vm301, %v284, 0
      %v378 = vsel %vm301, %v285, 0
      %v381 = vsel %vm301, %v286, 0
      %v384 = vsel %vm301, %v287, 0
      %v387 = vsel %vm301, %v288, 0
      %v390 = vsel %vm301, %v289, 0
      %v393 = vsel %vm301, %v290, 0
      %v396 = vsel %vm301, %v291, 0
      %398 = vmatprep.subr.mxu0 0.0
      %399 = vmatpush1.msra.mxu0 %v292
      %400 = vmatprep.subr.mxu0 0.0
      %401 = vmatpush1.msra.mxu0 %v293
      %402 = vmatprep.subr.mxu0 0.0
      %403 = vmatpush1.msra.mxu0 %v294
      %404 = vmatprep.subr.mxu0 0.0
      %405 = vmatpush1.msra.mxu0 %v295
      %406 = vmatprep.subr.mxu0 0.0
      %407 = vmatpush1.msra.mxu0 0.0
      %408 = vmatprep.subr.mxu0 0.0
      %409 = vmatpush1.msra.mxu0 0.0
      %410 = vmatprep.subr.mxu0 0.0
      %411 = vmatpush1.msra.mxu0 0.0
      %412 = vmatprep.subr.mxu0 0.0
      %413 = vmatpush1.msra.mxu0 0.0
      %414 = vmatprep.subr.mxu0 0.0
      %415 = vmatpush1.msra.mxu0 0.0
      %416 = vmatprep.subr.mxu0 0.0
      %417 = vmatpush1.msra.mxu0 0.0
      %418 = vmatprep.subr.mxu0 0.0
      %419 = vmatpush1.msra.mxu0 0.0
      %420 = vmatprep.subr.mxu0 0.0
      %421 = vmatpush1.msra.mxu0 0.0
      %422 = vmatprep.subr.mxu0 0.0
      %423 = vmatpush1.msra.mxu0 0.0
      %424 = vmatprep.subr.mxu0 0.0
      %425 = vmatpush1.msra.mxu0 0.0
      %426 = vmatprep.subr.mxu0 0.0
      %427 = vmatpush1.msra.mxu0 0.0
      %428 = vmatprep.subr.mxu0 0.0
      %429 = vmatpush1.msra.mxu0 0.0
      %430 = vmatprep.subr.mxu0 0.0
      %431 = vmatpush1.msra.mxu0 0.0
      %432 = vmatprep.subr.mxu0 0.0
      %433 = vmatpush1.msra.mxu0 0.0
      %434 = vmatprep.subr.mxu0 0.0
      %435 = vmatpush1.msra.mxu0 0.0
      %436 = vmatprep.subr.mxu0 0.0
      %437 = vmatpush1.msra.mxu0 0.0
      %438 = vmatprep.subr.mxu0 0.0
      %439 = vmatpush1.msra.mxu0 0.0
      %440 = vmatprep.subr.mxu0 0.0
      %441 = vmatpush1.msra.mxu0 0.0
      %442 = vmatprep.subr.mxu0 0.0
      %443 = vmatpush1.msra.mxu0 0.0
      %444 = vmatprep.subr.mxu0 0.0
      %445 = vmatpush1.msra.mxu0 0.0
      %446 = vmatprep.subr.mxu0 0.0
      %447 = vmatpush1.msra.mxu0 0.0
      %448 = vmatprep.subr.mxu0 0.0
      %449 = vmatpush1.msra.mxu0 0.0
      %450 = vmatprep.subr.mxu0 0.0
      %451 = vmatpush1.msra.mxu0 0.0
      %452 = vmatprep.subr.mxu0 0.0
      %453 = vmatpush1.msra.mxu0 0.0
      %454 = vmatprep.subr.mxu0 0.0
      %455 = vmatpush1.msra.mxu0 0.0
      %456 = vmatprep.subr.mxu0 0.0
      %457 = vmatpush1.msra.mxu0 0.0
      %458 = vmatprep.subr.mxu0 0.0
      %459 = vmatpush1.msra.mxu0 0.0
      %460 = vmatprep.subr.mxu0 0.0
      %461 = vmatpush1.msra.mxu0 0.0
      %462 = vmatprep.mubr.f32.mxu0 0.0
      %463 = vmatmul.mubr.f32.gmra.mrb[0].mxu0 %v303
      %v464 = vpop.f32.mrb[0].mxu0
      %v465 = vadd.f32 %v300, %v464
      %v466 = vpop.f32.mrb[0].mxu0
      %467 = vmatprep.mubr.f32.mxu0 0.0
      %468 = vmatmul.mubr.f32.gmra.mrb[0].mxu0 %v306
      %v469 = vpop.f32.mrb[0].mxu0
      %v470 = vadd.f32 %v300, %v469
      %v471 = vpop.f32.mrb[0].mxu0
      %472 = vmatprep.mubr.f32.mxu0 0.0
      %473 = vmatmul.mubr.f32.gmra.mrb[0].mxu0 %v309
      %v474 = vpop.f32.mrb[0].mxu0
      %v475 = vadd.f32 %v300, %v474
      %v476 = vpop.f32.mrb[0].mxu0
      %477 = vmatprep.mubr.f32.mxu0 0.0
      %478 = vmatmul.mubr.f32.gmra.mrb[0].mxu0 %v312
      %v479 = vpop.f32.mrb[0].mxu0
      %v480 = vadd.f32 %v300, %v479
      %v481 = vpop.f32.mrb[0].mxu0
      %482 = vmatprep.mubr.f32.mxu0 0.0
      %483 = vmatmul.mubr.f32.gmra.mrb[0].mxu0 %v315
      %v484 = vpop.f32.mrb[0].mxu0
      %v485 = vadd.f32 %v300, %v484
      %v486 = vpop.f32.mrb[0].mxu0
      %487 = vmatprep.mubr.f32.mxu0 0.0
      %488 = vmatmul.mubr.f32.gmra.mrb[0].mxu0 %v318
      %v489 = vpop.f32.mrb[0].mxu0
      %v490 = vadd.f32 %v300, %v489
      %v491 = vpop.f32.mrb[0].mxu0
      %492 = vmatprep.mubr.f32.mxu0 0.0
      %493 = vmatmul.mubr.f32.gmra.mrb[0].mxu0 %v321
      %v494 = vpop.f32.mrb[0].mxu0
      %v495 = vadd.f32 %v300, %v494
      %v496 = vpop.f32.mrb[0].mxu0
      %497 = vmatprep.mubr.f32.mxu0 0.0
      %498 = vmatmul.mubr.f32.gmra.mrb[0].mxu0 %v324
      %v499 = vpop.f32.mrb[0].mxu0
      %v500 = vadd.f32 %v300, %v499
      %v501 = vpop.f32.mrb[0].mxu0
      %502 = vmatprep.mubr.f32.mxu0 0.0
      %503 = vmatmul.mubr.f32.gmra.mrb[0].mxu0 %v327
      %v504 = vpop.f32.mrb[0].mxu0
      %v505 = vadd.f32 %v300, %v504
      %v506 = vpop.f32.mrb[0].mxu0
      %507 = vmatprep.mubr.f32.mxu0 0.0
      %508 = vmatmul.mubr.f32.gmra.mrb[0].mxu0 %v330
      %v509 = vpop.f32.mrb[0].mxu0
      %v510 = vadd.f32 %v300, %v509
      %v511 = vpop.f32.mrb[0].mxu0
      %512 = vmatprep.mubr.f32.mxu0 0.0
      %513 = vmatmul.mubr.f32.gmra.mrb[0].mxu0 %v333
      %v514 = vpop.f32.mrb[0].mxu0
      %v515 = vadd.f32 %v300, %v514
      %v516 = vpop.f32.mrb[0].mxu0
      %517 = vmatprep.mubr.f32.mxu0 0.0
      %518 = vmatmul.mubr.f32.gmra.mrb[0].mxu0 %v336
      %v519 = vpop.f32.mrb[0].mxu0
      %v520 = vadd.f32 %v300, %v519
      %v521 = vpop.f32.mrb[0].mxu0
      %522 = vmatprep.mubr.f32.mxu0 0.0
      %523 = vmatmul.mubr.f32.gmra.mrb[0].mxu0 %v339
      %v524 = vpop.f32.mrb[0].mxu0
      %v525 = vadd.f32 %v300, %v524
      %v526 = vpop.f32.mrb[0].mxu0
      %527 = vmatprep.mubr.f32.mxu0 0.0
      %528 = vmatmul.mubr.f32.gmra.mrb[0].mxu0 %v342
      %v529 = vpop.f32.mrb[0].mxu0
      %v530 = vadd.f32 %v300, %v529
      %v531 = vpop.f32.mrb[0].mxu0
      %532 = vmatprep.mubr.f32.mxu0 0.0
      %533 = vmatmul.mubr.f32.gmra.mrb[0].mxu0 %v345
      %v534 = vpop.f32.mrb[0].mxu0
      %v535 = vadd.f32 %v300, %v534
      %v536 = vpop.f32.mrb[0].mxu0
      %537 = vmatprep.mubr.f32.mxu0 0.0
      %538 = vmatmul.mubr.f32.gmra.mrb[0].mxu0 %v348
      %v539 = vpop.f32.mrb[0].mxu0
      %v540 = vadd.f32 %v300, %v539
      %v541 = vpop.f32.mrb[0].mxu0
      %542 = vmatprep.mubr.f32.mxu0 0.0
      %543 = vmatmul.mubr.f32.gmra.mrb[0].mxu0 %v351
      %v544 = vpop.f32.mrb[0].mxu0
      %v545 = vadd.f32 %v300, %v544
      %v546 = vpop.f32.mrb[0].mxu0
      %547 = vmatprep.mubr.f32.mxu0 0.0
      %548 = vmatmul.mubr.f32.gmra.mrb[0].mxu0 %v354
      %v549 = vpop.f32.mrb[0].mxu0
      %v550 = vadd.f32 %v300, %v549
      %v551 = vpop.f32.mrb[0].mxu0
      %552 = vmatprep.mubr.f32.mxu0 0.0
      %553 = vmatmul.mubr.f32.gmra.mrb[0].mxu0 %v357
      %v554 = vpop.f32.mrb[0].mxu0
      %v555 = vadd.f32 %v300, %v554
      %v556 = vpop.f32.mrb[0].mxu0
      %557 = vmatprep.mubr.f32.mxu0 0.0
      %558 = vmatmul.mubr.f32.gmra.mrb[0].mxu0 %v360
      %v559 = vpop.f32.mrb[0].mxu0
      %v560 = vadd.f32 %v300, %v559
      %v561 = vpop.f32.mrb[0].mxu0
      %562 = vmatprep.mubr.f32.mxu0 0.0
      %563 = vmatmul.mubr.f32.gmra.mrb[0].mxu0 %v363
      %v564 = vpop.f32.mrb[0].mxu0
      %v565 = vadd.f32 %v300, %v564
      %v566 = vpop.f32.mrb[0].mxu0
      %567 = vmatprep.mubr.f32.mxu0 0.0
      %568 = vmatmul.mubr.f32.gmra.mrb[0].mxu0 %v366
      %v569 = vpop.f32.mrb[0].mxu0
      %v570 = vadd.f32 %v300, %v569
      %v571 = vpop.f32.mrb[0].mxu0
      %572 = vmatprep.mubr.f32.mxu0 0.0
      %573 = vmatmul.mubr.f32.gmra.mrb[0].mxu0 %v369
      %v574 = vpop.f32.mrb[0].mxu0
      %v575 = vadd.f32 %v300, %v574
      %v576 = vpop.f32.mrb[0].mxu0
      %577 = vmatprep.mubr.f32.mxu0 0.0
      %578 = vmatmul.mubr.f32.gmra.mrb[0].mxu0 %v372
      %v579 = vpop.f32.mrb[0].mxu0
      %v580 = vadd.f32 %v300, %v579
      %v581 = vpop.f32.mrb[0].mxu0
      %582 = vmatprep.mubr.f32.mxu0 0.0
      %583 = vmatmul.mubr.f32.gmra.mrb[0].mxu0 %v375
      %v584 = vpop.f32.mrb[0].mxu0
      %v585 = vadd.f32 %v300, %v584
      %v586 = vpop.f32.mrb[0].mxu0
      %587 = vmatprep.mubr.f32.mxu0 0.0
      %588 = vmatmul.mubr.f32.gmra.mrb[0].mxu0 %v378
      %v589 = vpop.f32.mrb[0].mxu0
      %v590 = vadd.f32 %v300, %v589
      %v591 = vpop.f32.mrb[0].mxu0
      %592 = vmatprep.mubr.f32.mxu0 0.0
      %593 = vmatmul.mubr.f32.gmra.mrb[0].mxu0 %v381
      %v594 = vpop.f32.mrb[0].mxu0
      %v595 = vadd.f32 %v300, %v594
      %v596 = vpop.f32.mrb[0].mxu0
      %597 = vmatprep.mubr.f32.mxu0 0.0
      %598 = vmatmul.mubr.f32.gmra.mrb[0].mxu0 %v384
      %v599 = vpop.f32.mrb[0].mxu0
      %v600 = vadd.f32 %v300, %v599
      %v601 = vpop.f32.mrb[0].mxu0
      %602 = vmatprep.mubr.f32.mxu0 0.0
      %603 = vmatmul.mubr.f32.gmra.mrb[0].mxu0 %v387
      %v604 = vpop.f32.mrb[0].mxu0
      %v605 = vadd.f32 %v300, %v604
      %v606 = vpop.f32.mrb[0].mxu0
      %607 = vmatprep.mubr.f32.mxu0 0.0
      %608 = vmatmul.mubr.f32.gmra.mrb[0].mxu0 %v390
      %v609 = vpop.f32.mrb[0].mxu0
      %v610 = vadd.f32 %v300, %v609
      %v611 = vpop.f32.mrb[0].mxu0
      %612 = vmatprep.mubr.f32.mxu0 0.0
      %613 = vmatmul.mubr.f32.gmra.mrb[0].mxu0 %v393
      %v614 = vpop.f32.mrb[0].mxu0
      %v615 = vadd.f32 %v300, %v614
      %v616 = vpop.f32.mrb[0].mxu0
      %617 = vmatprep.mubr.f32.mxu0 0.0
      %618 = vmatmul.mubr.f32.gmra.mrb[0].mxu0 %v396
      %v619 = vpop.f32.mrb[0].mxu0
      %v620 = vadd.f32 %v300, %v619
      %v621 = vpop.f32.mrb[0].mxu0
      %622 = vdwg.mxu0
      %v623 = vmax.f32 %v465, 0.0
      %v624 = vmax.f32 %v470, 0.0
      %v625 = vmax.f32 %v475, 0.0
      %v626 = vmax.f32 %v480, 0.0
      %v627 = vmax.f32 %v485, 0.0
      %v628 = vmax.f32 %v490, 0.0
      %v629 = vmax.f32 %v495, 0.0
      %v630 = vmax.f32 %v500, 0.0
      %v631 = vmax.f32 %v505, 0.0
      %v632 = vmax.f32 %v510, 0.0
      %v633 = vmax.f32 %v515, 0.0
      %v634 = vmax.f32 %v520, 0.0
      %v635 = vmax.f32 %v525, 0.0
      %v636 = vmax.f32 %v530, 0.0
      %v637 = vmax.f32 %v535, 0.0
      %v638 = vmax.f32 %v540, 0.0
      %v639 = vmax.f32 %v545, 0.0
      %v640 = vmax.f32 %v550, 0.0
      %v641 = vmax.f32 %v555, 0.0
      %v642 = vmax.f32 %v560, 0.0
      %v643 = vmax.f32 %v565, 0.0
      %v644 = vmax.f32 %v570, 0.0
      %v645 = vmax.f32 %v575, 0.0
      %v646 = vmax.f32 %v580, 0.0
      %v647 = vmax.f32 %v585, 0.0
      %v648 = vmax.f32 %v590, 0.0
      %v649 = vmax.f32 %v595, 0.0
      %v650 = vmax.f32 %v600, 0.0
      %v651 = vmax.f32 %v605, 0.0
      %v652 = vmax.f32 %v610, 0.0
      %v653 = vmax.f32 %v615, 0.0
      %v654 = vmax.f32 %v620, 0.0
      %v655 = vld [vmem:[%s2 + $0x20] sm:$0xff]
      %v656 = vld [vmem:[%s2 + $0x28] sm:$0xff]
      %v657 = vld [vmem:[%s2 + $0x30] sm:$0xff]
      %v658 = vld [vmem:[%s2 + $0x38] sm:$0xff]
      %v659 = vld [vmem:[%s2 + $0x48] sm:$0x1]
      %v660 = vlaneseq
      %v661 = vshrl.u32 %v660, 7
      %v662 = vsub.s32 0, %v661
      %v663 = vrot.slane %v659, %v662
      %v665 = vsel %vm301, %v623, 0
      %v668 = vsel %vm301, %v624, 0
      %v671 = vsel %vm301, %v625, 0
      %v674 = vsel %vm301, %v626, 0
      %v677 = vsel %vm301, %v627, 0
      %v680 = vsel %vm301, %v628, 0
      %v683 = vsel %vm301, %v629, 0
      %v686 = vsel %vm301, %v630, 0
      %v689 = vsel %vm301, %v631, 0
      %v692 = vsel %vm301, %v632, 0
      %v695 = vsel %vm301, %v633, 0
      %v698 = vsel %vm301, %v634, 0
      %v701 = vsel %vm301, %v635, 0
      %v704 = vsel %vm301, %v636, 0
      %v707 = vsel %vm301, %v637, 0
      %v710 = vsel %vm301, %v638, 0
      %v713 = vsel %vm301, %v639, 0
      %v716 = vsel %vm301, %v640, 0
      %v719 = vsel %vm301, %v641, 0
      %v722 = vsel %vm301, %v642, 0
      %v725 = vsel %vm301, %v643, 0
      %v728 = vsel %vm301, %v644, 0
      %v731 = vsel %vm301, %v645, 0
      %v734 = vsel %vm301, %v646, 0
      %v737 = vsel %vm301, %v647, 0
      %v740 = vsel %vm301, %v648, 0
      %v743 = vsel %vm301, %v649, 0
      %v746 = vsel %vm301, %v650, 0
      %v749 = vsel %vm301, %v651, 0
      %v752 = vsel %vm301, %v652, 0
      %v755 = vsel %vm301, %v653, 0
      %v758 = vsel %vm301, %v654, 0
      %760 = vmatprep.subr.mxu0 0.0
      %761 = vmatpush1.msra.mxu0 %v655
      %762 = vmatprep.subr.mxu0 0.0
      %763 = vmatpush1.msra.mxu0 %v656
      %764 = vmatprep.subr.mxu0 0.0
      %765 = vmatpush1.msra.mxu0 %v657
      %766 = vmatprep.subr.mxu0 0.0
      %767 = vmatpush1.msra.mxu0 %v658
      %768 = vmatprep.subr.mxu0 0.0
      %769 = vmatpush1.msra.mxu0 0.0
      %770 = vmatprep.subr.mxu0 0.0
      %771 = vmatpush1.msra.mxu0 0.0
      %772 = vmatprep.subr.mxu0 0.0
      %773 = vmatpush1.msra.mxu0 0.0
      %774 = vmatprep.subr.mxu0 0.0
      %775 = vmatpush1.msra.mxu0 0.0
      %776 = vmatprep.subr.mxu0 0.0
      %777 = vmatpush1.msra.mxu0 0.0
      %778 = vmatprep.subr.mxu0 0.0
      %779 = vmatpush1.msra.mxu0 0.0
      %780 = vmatprep.subr.mxu0 0.0
      %781 = vmatpush1.msra.mxu0 0.0
      %782 = vmatprep.subr.mxu0 0.0
      %783 = vmatpush1.msra.mxu0 0.0
      %784 = vmatprep.subr.mxu0 0.0
      %785 = vmatpush1.msra.mxu0 0.0
      %786 = vmatprep.subr.mxu0 0.0
      %787 = vmatpush1.msra.mxu0 0.0
      %788 = vmatprep.subr.mxu0 0.0
      %789 = vmatpush1.msra.mxu0 0.0
      %790 = vmatprep.subr.mxu0 0.0
      %791 = vmatpush1.msra.mxu0 0.0
      %792 = vmatprep.subr.mxu0 0.0
      %793 = vmatpush1.msra.mxu0 0.0
      %794 = vmatprep.subr.mxu0 0.0
      %795 = vmatpush1.msra.mxu0 0.0
      %796 = vmatprep.subr.mxu0 0.0
      %797 = vmatpush1.msra.mxu0 0.0
      %798 = vmatprep.subr.mxu0 0.0
      %799 = vmatpush1.msra.mxu0 0.0
      %800 = vmatprep.subr.mxu0 0.0
      %801 = vmatpush1.msra.mxu0 0.0
      %802 = vmatprep.subr.mxu0 0.0
      %803 = vmatpush1.msra.mxu0 0.0
      %804 = vmatprep.subr.mxu0 0.0
      %805 = vmatpush1.msra.mxu0 0.0
      %806 = vmatprep.subr.mxu0 0.0
      %807 = vmatpush1.msra.mxu0 0.0
      %808 = vmatprep.subr.mxu0 0.0
      %809 = vmatpush1.msra.mxu0 0.0
      %810 = vmatprep.subr.mxu0 0.0
      %811 = vmatpush1.msra.mxu0 0.0
      %812 = vmatprep.subr.mxu0 0.0
      %813 = vmatpush1.msra.mxu0 0.0
      %814 = vmatprep.subr.mxu0 0.0
      %815 = vmatpush1.msra.mxu0 0.0
      %816 = vmatprep.subr.mxu0 0.0
      %817 = vmatpush1.msra.mxu0 0.0
      %818 = vmatprep.subr.mxu0 0.0
      %819 = vmatpush1.msra.mxu0 0.0
      %820 = vmatprep.subr.mxu0 0.0
      %821 = vmatpush1.msra.mxu0 0.0
      %822 = vmatprep.subr.mxu0 0.0
      %823 = vmatpush1.msra.mxu0 0.0
      %824 = vmatprep.mubr.f32.mxu0 0.0
      %825 = vmatmul.mubr.f32.gmra.mrb[0].mxu0 %v665
      %v826 = vpop.f32.mrb[0].mxu0
      %v827 = vadd.f32 %v663, %v826
      %v828 = vpop.f32.mrb[0].mxu0
      %829 = vmatprep.mubr.f32.mxu0 0.0
      %830 = vmatmul.mubr.f32.gmra.mrb[0].mxu0 %v668
      %v831 = vpop.f32.mrb[0].mxu0
      %v832 = vadd.f32 %v663, %v831
      %v833 = vpop.f32.mrb[0].mxu0
      %834 = vmatprep.mubr.f32.mxu0 0.0
      %835 = vmatmul.mubr.f32.gmra.mrb[0].mxu0 %v671
      %v836 = vpop.f32.mrb[0].mxu0
      %v837 = vadd.f32 %v663, %v836
      %v838 = vpop.f32.mrb[0].mxu0
      %839 = vmatprep.mubr.f32.mxu0 0.0
      %840 = vmatmul.mubr.f32.gmra.mrb[0].mxu0 %v674
      %v841 = vpop.f32.mrb[0].mxu0
      %v842 = vadd.f32 %v663, %v841
      %v843 = vpop.f32.mrb[0].mxu0
      %844 = vmatprep.mubr.f32.mxu0 0.0
      %845 = vmatmul.mubr.f32.gmra.mrb[0].mxu0 %v677
      %v846 = vpop.f32.mrb[0].mxu0
      %v847 = vadd.f32 %v663, %v846
      %v848 = vpop.f32.mrb[0].mxu0
      %849 = vmatprep.mubr.f32.mxu0 0.0
      %850 = vmatmul.mubr.f32.gmra.mrb[0].mxu0 %v680
      %v851 = vpop.f32.mrb[0].mxu0
      %v852 = vadd.f32 %v663, %v851
      %v853 = vpop.f32.mrb[0].mxu0
      %854 = vmatprep.mubr.f32.mxu0 0.0
      %855 = vmatmul.mubr.f32.gmra.mrb[0].mxu0 %v683
      %v856 = vpop.f32.mrb[0].mxu0
      %v857 = vadd.f32 %v663, %v856
      %v858 = vpop.f32.mrb[0].mxu0
      %859 = vmatprep.mubr.f32.mxu0 0.0
      %860 = vmatmul.mubr.f32.gmra.mrb[0].mxu0 %v686
      %v861 = vpop.f32.mrb[0].mxu0
      %v862 = vadd.f32 %v663, %v861
      %v863 = vpop.f32.mrb[0].mxu0
      %864 = vmatprep.mubr.f32.mxu0 0.0
      %865 = vmatmul.mubr.f32.gmra.mrb[0].mxu0 %v689
      %v866 = vpop.f32.mrb[0].mxu0
      %v867 = vadd.f32 %v663, %v866
      %v868 = vpop.f32.mrb[0].mxu0
      %869 = vmatprep.mubr.f32.mxu0 0.0
      %870 = vmatmul.mubr.f32.gmra.mrb[0].mxu0 %v692
      %v871 = vpop.f32.mrb[0].mxu0
      %v872 = vadd.f32 %v663, %v871
      %v873 = vpop.f32.mrb[0].mxu0
      %874 = vmatprep.mubr.f32.mxu0 0.0
      %875 = vmatmul.mubr.f32.gmra.mrb[0].mxu0 %v695
      %v876 = vpop.f32.mrb[0].mxu0
      %v877 = vadd.f32 %v663, %v876
      %v878 = vpop.f32.mrb[0].mxu0
      %879 = vmatprep.mubr.f32.mxu0 0.0
      %880 = vmatmul.mubr.f32.gmra.mrb[0].mxu0 %v698
      %v881 = vpop.f32.mrb[0].mxu0
      %v882 = vadd.f32 %v663, %v881
      %v883 = vpop.f32.mrb[0].mxu0
      %884 = vmatprep.mubr.f32.mxu0 0.0
      %885 = vmatmul.mubr.f32.gmra.mrb[0].mxu0 %v701
      %v886 = vpop.f32.mrb[0].mxu0
      %v887 = vadd.f32 %v663, %v886
      %v888 = vpop.f32.mrb[0].mxu0
      %889 = vmatprep.mubr.f32.mxu0 0.0
      %890 = vmatmul.mubr.f32.gmra.mrb[0].mxu0 %v704
      %v891 = vpop.f32.mrb[0].mxu0
      %v892 = vadd.f32 %v663, %v891
      %v893 = vpop.f32.mrb[0].mxu0
      %894 = vmatprep.mubr.f32.mxu0 0.0
      %895 = vmatmul.mubr.f32.gmra.mrb[0].mxu0 %v707
      %v896 = vpop.f32.mrb[0].mxu0
      %v897 = vadd.f32 %v663, %v896
      %v898 = vpop.f32.mrb[0].mxu0
      %899 = vmatprep.mubr.f32.mxu0 0.0
      %900 = vmatmul.mubr.f32.gmra.mrb[0].mxu0 %v710
      %v901 = vpop.f32.mrb[0].mxu0
      %v902 = vadd.f32 %v663, %v901
      %v903 = vpop.f32.mrb[0].mxu0
      %904 = vmatprep.mubr.f32.mxu0 0.0
      %905 = vmatmul.mubr.f32.gmra.mrb[0].mxu0 %v713
      %v906 = vpop.f32.mrb[0].mxu0
      %v907 = vadd.f32 %v663, %v906
      %v908 = vpop.f32.mrb[0].mxu0
      %909 = vmatprep.mubr.f32.mxu0 0.0
      %910 = vmatmul.mubr.f32.gmra.mrb[0].mxu0 %v716
      %v911 = vpop.f32.mrb[0].mxu0
      %v912 = vadd.f32 %v663, %v911
      %v913 = vpop.f32.mrb[0].mxu0
      %914 = vmatprep.mubr.f32.mxu0 0.0
      %915 = vmatmul.mubr.f32.gmra.mrb[0].mxu0 %v719
      %v916 = vpop.f32.mrb[0].mxu0
      %v917 = vadd.f32 %v663, %v916
      %v918 = vpop.f32.mrb[0].mxu0
      %919 = vmatprep.mubr.f32.mxu0 0.0
      %920 = vmatmul.mubr.f32.gmra.mrb[0].mxu0 %v722
      %v921 = vpop.f32.mrb[0].mxu0
      %v922 = vadd.f32 %v663, %v921
      %v923 = vpop.f32.mrb[0].mxu0
      %924 = vmatprep.mubr.f32.mxu0 0.0
      %925 = vmatmul.mubr.f32.gmra.mrb[0].mxu0 %v725
      %v926 = vpop.f32.mrb[0].mxu0
      %v927 = vadd.f32 %v663, %v926
      %v928 = vpop.f32.mrb[0].mxu0
      %929 = vmatprep.mubr.f32.mxu0 0.0
      %930 = vmatmul.mubr.f32.gmra.mrb[0].mxu0 %v728
      %v931 = vpop.f32.mrb[0].mxu0
      %v932 = vadd.f32 %v663, %v931
      %v933 = vpop.f32.mrb[0].mxu0
      %934 = vmatprep.mubr.f32.mxu0 0.0
      %935 = vmatmul.mubr.f32.gmra.mrb[0].mxu0 %v731
      %v936 = vpop.f32.mrb[0].mxu0
      %v937 = vadd.f32 %v663, %v936
      %v938 = vpop.f32.mrb[0].mxu0
      %939 = vmatprep.mubr.f32.mxu0 0.0
      %940 = vmatmul.mubr.f32.gmra.mrb[0].mxu0 %v734
      %v941 = vpop.f32.mrb[0].mxu0
      %v942 = vadd.f32 %v663, %v941
      %v943 = vpop.f32.mrb[0].mxu0
      %944 = vmatprep.mubr.f32.mxu0 0.0
      %945 = vmatmul.mubr.f32.gmra.mrb[0].mxu0 %v737
      %v946 = vpop.f32.mrb[0].mxu0
      %v947 = vadd.f32 %v663, %v946
      %v948 = vpop.f32.mrb[0].mxu0
      %949 = vmatprep.mubr.f32.mxu0 0.0
      %950 = vmatmul.mubr.f32.gmra.mrb[0].mxu0 %v740
      %v951 = vpop.f32.mrb[0].mxu0
      %v952 = vadd.f32 %v663, %v951
      %v953 = vpop.f32.mrb[0].mxu0
      %954 = vmatprep.mubr.f32.mxu0 0.0
      %955 = vmatmul.mubr.f32.gmra.mrb[0].mxu0 %v743
      %v956 = vpop.f32.mrb[0].mxu0
      %v957 = vadd.f32 %v663, %v956
      %v958 = vpop.f32.mrb[0].mxu0
      %959 = vmatprep.mubr.f32.mxu0 0.0
      %960 = vmatmul.mubr.f32.gmra.mrb[0].mxu0 %v746
      %v961 = vpop.f32.mrb[0].mxu0
      %v962 = vadd.f32 %v663, %v961
      %v963 = vpop.f32.mrb[0].mxu0
      %964 = vmatprep.mubr.f32.mxu0 0.0
      %965 = vmatmul.mubr.f32.gmra.mrb[0].mxu0 %v749
      %v966 = vpop.f32.mrb[0].mxu0
      %v967 = vadd.f32 %v663, %v966
      %v968 = vpop.f32.mrb[0].mxu0
      %969 = vmatprep.mubr.f32.mxu0 0.0
      %970 = vmatmul.mubr.f32.gmra.mrb[0].mxu0 %v752
      %v971 = vpop.f32.mrb[0].mxu0
      %v972 = vadd.f32 %v663, %v971
      %v973 = vpop.f32.mrb[0].mxu0
      %974 = vmatprep.mubr.f32.mxu0 0.0
      %975 = vmatmul.mubr.f32.gmra.mrb[0].mxu0 %v755
      %v976 = vpop.f32.mrb[0].mxu0
      %v977 = vadd.f32 %v663, %v976
      %v978 = vpop.f32.mrb[0].mxu0
      %979 = vmatprep.mubr.f32.mxu0 0.0
      %980 = vmatmul.mubr.f32.gmra.mrb[0].mxu0 %v758
      %v981 = vpop.f32.mrb[0].mxu0
      %v982 = vadd.f32 %v663, %v981
      %v983 = vpop.f32.mrb[0].mxu0
      %984 = vdwg.mxu0
      %v985 = vmax.f32 %v827, 0.0
      %v986 = vmax.f32 %v832, 0.0
      %v987 = vmax.f32 %v837, 0.0
      %v988 = vmax.f32 %v842, 0.0
      %v989 = vmax.f32 %v847, 0.0
      %v990 = vmax.f32 %v852, 0.0
      %v991 = vmax.f32 %v857, 0.0
      %v992 = vmax.f32 %v862, 0.0
      %v993 = vmax.f32 %v867, 0.0
      %v994 = vmax.f32 %v872, 0.0
      %v995 = vmax.f32 %v877, 0.0
      %v996 = vmax.f32 %v882, 0.0
      %v997 = vmax.f32 %v887, 0.0
      %v998 = vmax.f32 %v892, 0.0
      %v999 = vmax.f32 %v897, 0.0
      %v1000 = vmax.f32 %v902, 0.0
      %v1001 = vmax.f32 %v907, 0.0
      %v1002 = vmax.f32 %v912, 0.0
      %v1003 = vmax.f32 %v917, 0.0
      %v1004 = vmax.f32 %v922, 0.0
      %v1005 = vmax.f32 %v927, 0.0
      %v1006 = vmax.f32 %v932, 0.0
      %v1007 = vmax.f32 %v937, 0.0
      %v1008 = vmax.f32 %v942, 0.0
      %v1009 = vmax.f32 %v947, 0.0
      %v1010 = vmax.f32 %v952, 0.0
      %v1011 = vmax.f32 %v957, 0.0
      %v1012 = vmax.f32 %v962, 0.0
      %v1013 = vmax.f32 %v967, 0.0
      %v1014 = vmax.f32 %v972, 0.0
      %v1015 = vmax.f32 %v977, 0.0
      %v1016 = vmax.f32 %v982, 0.0
      %v1017 = vld [vmem:[%s2 + $0x50] sm:$0xff]
      %v1018 = vld [vmem:[%s2 + $0x58] sm:$0xff]
      %v1019 = vld [vmem:[%s2 + $0x60] sm:$0xff]
      %v1020 = vld [vmem:[%s2 + $0x68] sm:$0xff]
      %v1021 = vld [vmem:[%s2 + $0x70] sm:$0x1]
      %v1022 = vlaneseq
      %v1023 = vshrl.u32 %v1022, 7
      %v1024 = vsub.s32 0, %v1023
      %v1025 = vrot.slane %v1021, %v1024
      %v1027 = vsel %vm301, %v985, 0
      %v1030 = vsel %vm301, %v986, 0
      %v1033 = vsel %vm301, %v987, 0
      %v1036 = vsel %vm301, %v988, 0
      %v1039 = vsel %vm301, %v989, 0
      %v1042 = vsel %vm301, %v990, 0
      %v1045 = vsel %vm301, %v991, 0
      %v1048 = vsel %vm301, %v992, 0
      %v1051 = vsel %vm301, %v993, 0
      %v1054 = vsel %vm301, %v994, 0
      %v1057 = vsel %vm301, %v995, 0
      %v1060 = vsel %vm301, %v996, 0
      %v1063 = vsel %vm301, %v997, 0
      %v1066 = vsel %vm301, %v998, 0
      %v1069 = vsel %vm301, %v999, 0
      %v1072 = vsel %vm301, %v1000, 0
      %v1075 = vsel %vm301, %v1001, 0
      %v1078 = vsel %vm301, %v1002, 0
      %v1081 = vsel %vm301, %v1003, 0
      %v1084 = vsel %vm301, %v1004, 0
      %v1087 = vsel %vm301, %v1005, 0
      %v1090 = vsel %vm301, %v1006, 0
      %v1093 = vsel %vm301, %v1007, 0
      %v1096 = vsel %vm301, %v1008, 0
      %v1099 = vsel %vm301, %v1009, 0
      %v1102 = vsel %vm301, %v1010, 0
      %v1105 = vsel %vm301, %v1011, 0
      %v1108 = vsel %vm301, %v1012, 0
      %v1111 = vsel %vm301, %v1013, 0
      %v1114 = vsel %vm301, %v1014, 0
      %v1117 = vsel %vm301, %v1015, 0
      %v1120 = vsel %vm301, %v1016, 0
      %1122 = vmatprep.subr.mxu0 0.0
      %1123 = vmatpush1.msra.mxu0 %v1017
      %1124 = vmatprep.subr.mxu0 0.0
      %1125 = vmatpush1.msra.mxu0 %v1018
      %1126 = vmatprep.subr.mxu0 0.0
      %1127 = vmatpush1.msra.mxu0 %v1019
      %1128 = vmatprep.subr.mxu0 0.0
      %1129 = vmatpush1.msra.mxu0 %v1020
      %1130 = vmatprep.subr.mxu0 0.0
      %1131 = vmatpush1.msra.mxu0 0.0
      %1132 = vmatprep.subr.mxu0 0.0
      %1133 = vmatpush1.msra.mxu0 0.0
      %1134 = vmatprep.subr.mxu0 0.0
      %1135 = vmatpush1.msra.mxu0 0.0
      %1136 = vmatprep.subr.mxu0 0.0
      %1137 = vmatpush1.msra.mxu0 0.0
      %1138 = vmatprep.subr.mxu0 0.0
      %1139 = vmatpush1.msra.mxu0 0.0
      %1140 = vmatprep.subr.mxu0 0.0
      %1141 = vmatpush1.msra.mxu0 0.0
      %1142 = vmatprep.subr.mxu0 0.0
      %1143 = vmatpush1.msra.mxu0 0.0
      %1144 = vmatprep.subr.mxu0 0.0
      %1145 = vmatpush1.msra.mxu0 0.0
      %1146 = vmatprep.subr.mxu0 0.0
      %1147 = vmatpush1.msra.mxu0 0.0
      %1148 = vmatprep.subr.mxu0 0.0
      %1149 = vmatpush1.msra.mxu0 0.0
      %1150 = vmatprep.subr.mxu0 0.0
      %1151 = vmatpush1.msra.mxu0 0.0
      %1152 = vmatprep.subr.mxu0 0.0
      %1153 = vmatpush1.msra.mxu0 0.0
      %1154 = vmatprep.subr.mxu0 0.0
      %1155 = vmatpush1.msra.mxu0 0.0
      %1156 = vmatprep.subr.mxu0 0.0
      %1157 = vmatpush1.msra.mxu0 0.0
      %1158 = vmatprep.subr.mxu0 0.0
      %1159 = vmatpush1.msra.mxu0 0.0
      %1160 = vmatprep.subr.mxu0 0.0
      %1161 = vmatpush1.msra.mxu0 0.0
      %1162 = vmatprep.subr.mxu0 0.0
      %1163 = vmatpush1.msra.mxu0 0.0
      %1164 = vmatprep.subr.mxu0 0.0
      %1165 = vmatpush1.msra.mxu0 0.0
      %1166 = vmatprep.subr.mxu0 0.0
      %1167 = vmatpush1.msra.mxu0 0.0
      %1168 = vmatprep.subr.mxu0 0.0
      %1169 = vmatpush1.msra.mxu0 0.0
      %1170 = vmatprep.subr.mxu0 0.0
      %1171 = vmatpush1.msra.mxu0 0.0
      %1172 = vmatprep.subr.mxu0 0.0
      %1173 = vmatpush1.msra.mxu0 0.0
      %1174 = vmatprep.subr.mxu0 0.0
      %1175 = vmatpush1.msra.mxu0 0.0
      %1176 = vmatprep.subr.mxu0 0.0
      %1177 = vmatpush1.msra.mxu0 0.0
      %1178 = vmatprep.subr.mxu0 0.0
      %1179 = vmatpush1.msra.mxu0 0.0
      %1180 = vmatprep.subr.mxu0 0.0
      %1181 = vmatpush1.msra.mxu0 0.0
      %1182 = vmatprep.subr.mxu0 0.0
      %1183 = vmatpush1.msra.mxu0 0.0
      %1184 = vmatprep.subr.mxu0 0.0
      %1185 = vmatpush1.msra.mxu0 0.0
      %1186 = vmatprep.mubr.f32.mxu0 0.0
      %1187 = vmatmul.mubr.f32.gmra.mrb[0].mxu0 %v1027
      %v1188 = vpop.f32.mrb[0].mxu0
      %v1189 = vadd.f32 %v1025, %v1188
      %v1190 = vpop.f32.mrb[0].mxu0
      %1191 = vmatprep.mubr.f32.mxu0 0.0
      %1192 = vmatmul.mubr.f32.gmra.mrb[0].mxu0 %v1030
      %v1193 = vpop.f32.mrb[0].mxu0
      %v1194 = vadd.f32 %v1025, %v1193
      %v1195 = vpop.f32.mrb[0].mxu0
      %1196 = vmatprep.mubr.f32.mxu0 0.0
      %1197 = vmatmul.mubr.f32.gmra.mrb[0].mxu0 %v1033
      %v1198 = vpop.f32.mrb[0].mxu0
      %v1199 = vadd.f32 %v1025, %v1198
      %v1200 = vpop.f32.mrb[0].mxu0
      %1201 = vmatprep.mubr.f32.mxu0 0.0
      %1202 = vmatmul.mubr.f32.gmra.mrb[0].mxu0 %v1036
      %v1203 = vpop.f32.mrb[0].mxu0
      %v1204 = vadd.f32 %v1025, %v1203
      %v1205 = vpop.f32.mrb[0].mxu0
      %1206 = vmatprep.mubr.f32.mxu0 0.0
      %1207 = vmatmul.mubr.f32.gmra.mrb[0].mxu0 %v1039
      %v1208 = vpop.f32.mrb[0].mxu0
      %v1209 = vadd.f32 %v1025, %v1208
      %v1210 = vpop.f32.mrb[0].mxu0
      %1211 = vmatprep.mubr.f32.mxu0 0.0
      %1212 = vmatmul.mubr.f32.gmra.mrb[0].mxu0 %v1042
      %v1213 = vpop.f32.mrb[0].mxu0
      %v1214 = vadd.f32 %v1025, %v1213
      %v1215 = vpop.f32.mrb[0].mxu0
      %1216 = vmatprep.mubr.f32.mxu0 0.0
      %1217 = vmatmul.mubr.f32.gmra.mrb[0].mxu0 %v1045
      %v1218 = vpop.f32.mrb[0].mxu0
      %v1219 = vadd.f32 %v1025, %v1218
      %v1220 = vpop.f32.mrb[0].mxu0
      %1221 = vmatprep.mubr.f32.mxu0 0.0
      %1222 = vmatmul.mubr.f32.gmra.mrb[0].mxu0 %v1048
      %v1223 = vpop.f32.mrb[0].mxu0
      %v1224 = vadd.f32 %v1025, %v1223
      %v1225 = vpop.f32.mrb[0].mxu0
      %1226 = vmatprep.mubr.f32.mxu0 0.0
      %1227 = vmatmul.mubr.f32.gmra.mrb[0].mxu0 %v1051
      %v1228 = vpop.f32.mrb[0].mxu0
      %v1229 = vadd.f32 %v1025, %v1228
      %v1230 = vpop.f32.mrb[0].mxu0
      %1231 = vmatprep.mubr.f32.mxu0 0.0
      %1232 = vmatmul.mubr.f32.gmra.mrb[0].mxu0 %v1054
      %v1233 = vpop.f32.mrb[0].mxu0
      %v1234 = vadd.f32 %v1025, %v1233
      %v1235 = vpop.f32.mrb[0].mxu0
      %1236 = vmatprep.mubr.f32.mxu0 0.0
      %1237 = vmatmul.mubr.f32.gmra.mrb[0].mxu0 %v1057
      %v1238 = vpop.f32.mrb[0].mxu0
      %v1239 = vadd.f32 %v1025, %v1238
      %v1240 = vpop.f32.mrb[0].mxu0
      %1241 = vmatprep.mubr.f32.mxu0 0.0
      %1242 = vmatmul.mubr.f32.gmra.mrb[0].mxu0 %v1060
      %v1243 = vpop.f32.mrb[0].mxu0
      %v1244 = vadd.f32 %v1025, %v1243
      %v1245 = vpop.f32.mrb[0].mxu0
      %1246 = vmatprep.mubr.f32.mxu0 0.0
      %1247 = vmatmul.mubr.f32.gmra.mrb[0].mxu0 %v1063
      %v1248 = vpop.f32.mrb[0].mxu0
      %v1249 = vadd.f32 %v1025, %v1248
      %v1250 = vpop.f32.mrb[0].mxu0
      %1251 = vmatprep.mubr.f32.mxu0 0.0
      %1252 = vmatmul.mubr.f32.gmra.mrb[0].mxu0 %v1066
      %v1253 = vpop.f32.mrb[0].mxu0
      %v1254 = vadd.f32 %v1025, %v1253
      %v1255 = vpop.f32.mrb[0].mxu0
      %1256 = vmatprep.mubr.f32.mxu0 0.0
      %1257 = vmatmul.mubr.f32.gmra.mrb[0].mxu0 %v1069
      %v1258 = vpop.f32.mrb[0].mxu0
      %v1259 = vadd.f32 %v1025, %v1258
      %v1260 = vpop.f32.mrb[0].mxu0
      %1261 = vmatprep.mubr.f32.mxu0 0.0
      %1262 = vmatmul.mubr.f32.gmra.mrb[0].mxu0 %v1072
      %v1263 = vpop.f32.mrb[0].mxu0
      %v1264 = vadd.f32 %v1025, %v1263
      %v1265 = vpop.f32.mrb[0].mxu0
      %1266 = vmatprep.mubr.f32.mxu0 0.0
      %1267 = vmatmul.mubr.f32.gmra.mrb[0].mxu0 %v1075
      %v1268 = vpop.f32.mrb[0].mxu0
      %v1269 = vadd.f32 %v1025, %v1268
      %v1270 = vpop.f32.mrb[0].mxu0
      %1271 = vmatprep.mubr.f32.mxu0 0.0
      %1272 = vmatmul.mubr.f32.gmra.mrb[0].mxu0 %v1078
      %v1273 = vpop.f32.mrb[0].mxu0
      %v1274 = vadd.f32 %v1025, %v1273
      %v1275 = vpop.f32.mrb[0].mxu0
      %1276 = vmatprep.mubr.f32.mxu0 0.0
      %1277 = vmatmul.mubr.f32.gmra.mrb[0].mxu0 %v1081
      %v1278 = vpop.f32.mrb[0].mxu0
      %v1279 = vadd.f32 %v1025, %v1278
      %v1280 = vpop.f32.mrb[0].mxu0
      %1281 = vmatprep.mubr.f32.mxu0 0.0
      %1282 = vmatmul.mubr.f32.gmra.mrb[0].mxu0 %v1084
      %v1283 = vpop.f32.mrb[0].mxu0
      %v1284 = vadd.f32 %v1025, %v1283
      %v1285 = vpop.f32.mrb[0].mxu0
      %1286 = vmatprep.mubr.f32.mxu0 0.0
      %1287 = vmatmul.mubr.f32.gmra.mrb[0].mxu0 %v1087
      %v1288 = vpop.f32.mrb[0].mxu0
      %v1289 = vadd.f32 %v1025, %v1288
      %v1290 = vpop.f32.mrb[0].mxu0
      %1291 = vmatprep.mubr.f32.mxu0 0.0
      %1292 = vmatmul.mubr.f32.gmra.mrb[0].mxu0 %v1090
      %v1293 = vpop.f32.mrb[0].mxu0
      %v1294 = vadd.f32 %v1025, %v1293
      %v1295 = vpop.f32.mrb[0].mxu0
      %1296 = vmatprep.mubr.f32.mxu0 0.0
      %1297 = vmatmul.mubr.f32.gmra.mrb[0].mxu0 %v1093
      %v1298 = vpop.f32.mrb[0].mxu0
      %v1299 = vadd.f32 %v1025, %v1298
      %v1300 = vpop.f32.mrb[0].mxu0
      %1301 = vmatprep.mubr.f32.mxu0 0.0
      %1302 = vmatmul.mubr.f32.gmra.mrb[0].mxu0 %v1096
      %v1303 = vpop.f32.mrb[0].mxu0
      %v1304 = vadd.f32 %v1025, %v1303
      %v1305 = vpop.f32.mrb[0].mxu0
      %1306 = vmatprep.mubr.f32.mxu0 0.0
      %1307 = vmatmul.mubr.f32.gmra.mrb[0].mxu0 %v1099
      %v1308 = vpop.f32.mrb[0].mxu0
      %v1309 = vadd.f32 %v1025, %v1308
      %v1310 = vpop.f32.mrb[0].mxu0
      %1311 = vmatprep.mubr.f32.mxu0 0.0
      %1312 = vmatmul.mubr.f32.gmra.mrb[0].mxu0 %v1102
      %v1313 = vpop.f32.mrb[0].mxu0
      %v1314 = vadd.f32 %v1025, %v1313
      %v1315 = vpop.f32.mrb[0].mxu0
      %1316 = vmatprep.mubr.f32.mxu0 0.0
      %1317 = vmatmul.mubr.f32.gmra.mrb[0].mxu0 %v1105
      %v1318 = vpop.f32.mrb[0].mxu0
      %v1319 = vadd.f32 %v1025, %v1318
      %v1320 = vpop.f32.mrb[0].mxu0
      %1321 = vmatprep.mubr.f32.mxu0 0.0
      %1322 = vmatmul.mubr.f32.gmra.mrb[0].mxu0 %v1108
      %v1323 = vpop.f32.mrb[0].mxu0
      %v1324 = vadd.f32 %v1025, %v1323
      %v1325 = vpop.f32.mrb[0].mxu0
      %1326 = vmatprep.mubr.f32.mxu0 0.0
      %1327 = vmatmul.mubr.f32.gmra.mrb[0].mxu0 %v1111
      %v1328 = vpop.f32.mrb[0].mxu0
      %v1329 = vadd.f32 %v1025, %v1328
      %v1330 = vpop.f32.mrb[0].mxu0
      %1331 = vmatprep.mubr.f32.mxu0 0.0
      %1332 = vmatmul.mubr.f32.gmra.mrb[0].mxu0 %v1114
      %v1333 = vpop.f32.mrb[0].mxu0
      %v1334 = vadd.f32 %v1025, %v1333
      %v1335 = vpop.f32.mrb[0].mxu0
      %1336 = vmatprep.mubr.f32.mxu0 0.0
      %1337 = vmatmul.mubr.f32.gmra.mrb[0].mxu0 %v1117
      %v1338 = vpop.f32.mrb[0].mxu0
      %v1339 = vadd.f32 %v1025, %v1338
      %v1340 = vpop.f32.mrb[0].mxu0
      %1341 = vmatprep.mubr.f32.mxu0 0.0
      %1342 = vmatmul.mubr.f32.gmra.mrb[0].mxu0 %v1120
      %v1343 = vpop.f32.mrb[0].mxu0
      %v1344 = vadd.f32 %v1025, %v1343
      %v1345 = vpop.f32.mrb[0].mxu0
      %1346 = vdwg.mxu0
      %v1347 = vxor.u32 %v1189, 2147483648
      %v1348 = vxor.u32 %v1194, 2147483648
      %v1349 = vxor.u32 %v1199, 2147483648
      %v1350 = vxor.u32 %v1204, 2147483648
      %v1351 = vxor.u32 %v1209, 2147483648
      %v1352 = vxor.u32 %v1214, 2147483648
      %v1353 = vxor.u32 %v1219, 2147483648
      %v1354 = vxor.u32 %v1224, 2147483648
      %v1355 = vxor.u32 %v1229, 2147483648
      %v1356 = vxor.u32 %v1234, 2147483648
      %v1357 = vxor.u32 %v1239, 2147483648
      %v1358 = vxor.u32 %v1244, 2147483648
      %v1359 = vxor.u32 %v1249, 2147483648
      %v1360 = vxor.u32 %v1254, 2147483648
      %v1361 = vxor.u32 %v1259, 2147483648
      %v1362 = vxor.u32 %v1264, 2147483648
      %v1363 = vxor.u32 %v1269, 2147483648
      %v1364 = vxor.u32 %v1274, 2147483648
      %v1365 = vxor.u32 %v1279, 2147483648
      %v1366 = vxor.u32 %v1284, 2147483648
      %v1367 = vxor.u32 %v1289, 2147483648
      %v1368 = vxor.u32 %v1294, 2147483648
      %v1369 = vxor.u32 %v1299, 2147483648
      %v1370 = vxor.u32 %v1304, 2147483648
      %v1371 = vxor.u32 %v1309, 2147483648
      %v1372 = vxor.u32 %v1314, 2147483648
      %v1373 = vxor.u32 %v1319, 2147483648
      %v1374 = vxor.u32 %v1324, 2147483648
      %v1375 = vxor.u32 %v1329, 2147483648
      %v1376 = vxor.u32 %v1334, 2147483648
      %v1377 = vxor.u32 %v1339, 2147483648
      %v1378 = vxor.u32 %v1344, 2147483648
      %v1379 = vmul.f32 %v1347, 1.442695
      %v1380 = vpow.pop %v1379
      %v1381 = vmul.f32 %v1348, 1.442695
      %v1382 = vpow.pop %v1381
      %v1383 = vmul.f32 %v1349, 1.442695
      %v1384 = vpow.pop %v1383
      %v1385 = vmul.f32 %v1350, 1.442695
      %v1386 = vpow.pop %v1385
      %v1387 = vmul.f32 %v1351, 1.442695
      %v1388 = vpow.pop %v1387
      %v1389 = vmul.f32 %v1352, 1.442695
      %v1390 = vpow.pop %v1389
      %v1391 = vmul.f32 %v1353, 1.442695
      %v1392 = vpow.pop %v1391
      %v1393 = vmul.f32 %v1354, 1.442695
      %v1394 = vpow.pop %v1393
      %v1395 = vmul.f32 %v1355, 1.442695
      %v1396 = vpow.pop %v1395
      %v1397 = vmul.f32 %v1356, 1.442695
      %v1398 = vpow.pop %v1397
      %v1399 = vmul.f32 %v1357, 1.442695
      %v1400 = vpow.pop %v1399
      %v1401 = vmul.f32 %v1358, 1.442695
      %v1402 = vpow.pop %v1401
      %v1403 = vmul.f32 %v1359, 1.442695
      %v1404 = vpow.pop %v1403
      %v1405 = vmul.f32 %v1360, 1.442695
      %v1406 = vpow.pop %v1405
      %v1407 = vmul.f32 %v1361, 1.442695
      %v1408 = vpow.pop %v1407
      %v1409 = vmul.f32 %v1362, 1.442695
      %v1410 = vpow.pop %v1409
      %v1411 = vmul.f32 %v1363, 1.442695
      %v1412 = vpow.pop %v1411
      %v1413 = vmul.f32 %v1364, 1.442695
      %v1414 = vpow.pop %v1413
      %v1415 = vmul.f32 %v1365, 1.442695
      %v1416 = vpow.pop %v1415
      %v1417 = vmul.f32 %v1366, 1.442695
      %v1418 = vpow.pop %v1417
      %v1419 = vmul.f32 %v1367, 1.442695
      %v1420 = vpow.pop %v1419
      %v1421 = vmul.f32 %v1368, 1.442695
      %v1422 = vpow.pop %v1421
      %v1423 = vmul.f32 %v1369, 1.442695
      %v1424 = vpow.pop %v1423
      %v1425 = vmul.f32 %v1370, 1.442695
      %v1426 = vpow.pop %v1425
      %v1427 = vmul.f32 %v1371, 1.442695
      %v1428 = vpow.pop %v1427
      %v1429 = vmul.f32 %v1372, 1.442695
      %v1430 = vpow.pop %v1429
      %v1431 = vmul.f32 %v1373, 1.442695
      %v1432 = vpow.pop %v1431
      %v1433 = vmul.f32 %v1374, 1.442695
      %v1434 = vpow.pop %v1433
      %v1435 = vmul.f32 %v1375, 1.442695
      %v1436 = vpow.pop %v1435
      %v1437 = vmul.f32 %v1376, 1.442695
      %v1438 = vpow.pop %v1437
      %v1439 = vmul.f32 %v1377, 1.442695
      %v1440 = vpow.pop %v1439
      %v1441 = vmul.f32 %v1378, 1.442695
      %v1442 = vpow.pop %v1441
      %v1443 = vadd.f32 %v1380, 1.0
      %v1444 = vadd.f32 %v1382, 1.0
      %v1445 = vadd.f32 %v1384, 1.0
      %v1446 = vadd.f32 %v1386, 1.0
      %v1447 = vadd.f32 %v1388, 1.0
      %v1448 = vadd.f32 %v1390, 1.0
      %v1449 = vadd.f32 %v1392, 1.0
      %v1450 = vadd.f32 %v1394, 1.0
      %v1451 = vadd.f32 %v1396, 1.0
      %v1452 = vadd.f32 %v1398, 1.0
      %v1453 = vadd.f32 %v1400, 1.0
      %v1454 = vadd.f32 %v1402, 1.0
      %v1455 = vadd.f32 %v1404, 1.0
      %v1456 = vadd.f32 %v1406, 1.0
      %v1457 = vadd.f32 %v1408, 1.0
      %v1458 = vadd.f32 %v1410, 1.0
      %v1459 = vadd.f32 %v1412, 1.0
      %v1460 = vadd.f32 %v1414, 1.0
      %v1461 = vadd.f32 %v1416, 1.0
      %v1462 = vadd.f32 %v1418, 1.0
      %v1463 = vadd.f32 %v1420, 1.0
      %v1464 = vadd.f32 %v1422, 1.0
      %v1465 = vadd.f32 %v1424, 1.0
      %v1466 = vadd.f32 %v1426, 1.0
      %v1467 = vadd.f32 %v1428, 1.0
      %v1468 = vadd.f32 %v1430, 1.0
      %v1469 = vadd.f32 %v1432, 1.0
      %v1470 = vadd.f32 %v1434, 1.0
      %v1471 = vadd.f32 %v1436, 1.0
      %v1472 = vadd.f32 %v1438, 1.0
      %v1473 = vadd.f32 %v1440, 1.0
      %v1474 = vadd.f32 %v1442, 1.0
      %v1475 = vrcp.pop %v1443
      %v1476 = vmul.f32 1.0, %v1475
      %v1477 = vrcp.pop %v1444
      %v1478 = vmul.f32 1.0, %v1477
      %v1479 = vrcp.pop %v1445
      %v1480 = vmul.f32 1.0, %v1479
      %v1481 = vrcp.pop %v1446
      %v1482 = vmul.f32 1.0, %v1481
      %v1483 = vrcp.pop %v1447
      %v1484 = vmul.f32 1.0, %v1483
      %v1485 = vrcp.pop %v1448
      %v1486 = vmul.f32 1.0, %v1485
      %v1487 = vrcp.pop %v1449
      %v1488 = vmul.f32 1.0, %v1487
      %v1489 = vrcp.pop %v1450
      %v1490 = vmul.f32 1.0, %v1489
      %v1491 = vrcp.pop %v1451
      %v1492 = vmul.f32 1.0, %v1491
      %v1493 = vrcp.pop %v1452
      %v1494 = vmul.f32 1.0, %v1493
      %v1495 = vrcp.pop %v1453
      %v1496 = vmul.f32 1.0, %v1495
      %v1497 = vrcp.pop %v1454
      %v1498 = vmul.f32 1.0, %v1497
      %v1499 = vrcp.pop %v1455
      %v1500 = vmul.f32 1.0, %v1499
      %v1501 = vrcp.pop %v1456
      %v1502 = vmul.f32 1.0, %v1501
      %v1503 = vrcp.pop %v1457
      %v1504 = vmul.f32 1.0, %v1503
      %v1505 = vrcp.pop %v1458
      %v1506 = vmul.f32 1.0, %v1505
      %v1507 = vrcp.pop %v1459
      %v1508 = vmul.f32 1.0, %v1507
      %v1509 = vrcp.pop %v1460
      %v1510 = vmul.f32 1.0, %v1509
      %v1511 = vrcp.pop %v1461
      %v1512 = vmul.f32 1.0, %v1511
      %v1513 = vrcp.pop %v1462
      %v1514 = vmul.f32 1.0, %v1513
      %v1515 = vrcp.pop %v1463
      %v1516 = vmul.f32 1.0, %v1515
      %v1517 = vrcp.pop %v1464
      %v1518 = vmul.f32 1.0, %v1517
      %v1519 = vrcp.pop %v1465
      %v1520 = vmul.f32 1.0, %v1519
      %v1521 = vrcp.pop %v1466
      %v1522 = vmul.f32 1.0, %v1521
      %v1523 = vrcp.pop %v1467
      %v1524 = vmul.f32 1.0, %v1523
      %v1525 = vrcp.pop %v1468
      %v1526 = vmul.f32 1.0, %v1525
      %v1527 = vrcp.pop %v1469
      %v1528 = vmul.f32 1.0, %v1527
      %v1529 = vrcp.pop %v1470
      %v1530 = vmul.f32 1.0, %v1529
      %v1531 = vrcp.pop %v1471
      %v1532 = vmul.f32 1.0, %v1531
      %v1533 = vrcp.pop %v1472
      %v1534 = vmul.f32 1.0, %v1533
      %v1535 = vrcp.pop %v1473
      %v1536 = vmul.f32 1.0, %v1535
      %v1537 = vrcp.pop %v1474
      %v1538 = vmul.f32 1.0, %v1537
      %vm1539 = vcmask 7168
      %1540 = vst.msk [vmem:[%s194] sm:$0xff] %vm1539, %v1476
      %1541 = vst.msk [vmem:[%s194 + $0x8] sm:$0xff] %vm1539, %v1478
      %1542 = vst.msk [vmem:[%s194 + $0x10] sm:$0xff] %vm1539, %v1480
      %1543 = vst.msk [vmem:[%s194 + $0x18] sm:$0xff] %vm1539, %v1482
      %1544 = vst.msk [vmem:[%s194 + $0x20] sm:$0xff] %vm1539, %v1484
      %1545 = vst.msk [vmem:[%s194 + $0x28] sm:$0xff] %vm1539, %v1486
      %1546 = vst.msk [vmem:[%s194 + $0x30] sm:$0xff] %vm1539, %v1488
      %1547 = vst.msk [vmem:[%s194 + $0x38] sm:$0xff] %vm1539, %v1490
      %1548 = vst.msk [vmem:[%s194 + $0x40] sm:$0xff] %vm1539, %v1492
      %1549 = vst.msk [vmem:[%s194 + $0x48] sm:$0xff] %vm1539, %v1494
      %1550 = vst.msk [vmem:[%s194 + $0x50] sm:$0xff] %vm1539, %v1496
      %1551 = vst.msk [vmem:[%s194 + $0x58] sm:$0xff] %vm1539, %v1498
      %1552 = vst.msk [vmem:[%s194 + $0x60] sm:$0xff] %vm1539, %v1500
      %1553 = vst.msk [vmem:[%s194 + $0x68] sm:$0xff] %vm1539, %v1502
      %1554 = vst.msk [vmem:[%s194 + $0x70] sm:$0xff] %vm1539, %v1504
      %1555 = vst.msk [vmem:[%s194 + $0x78] sm:$0xff] %vm1539, %v1506
      %1556 = vst.msk [vmem:[%s194 + $0x80] sm:$0xff] %vm1539, %v1508
      %1557 = vst.msk [vmem:[%s194 + $0x88] sm:$0xff] %vm1539, %v1510
      %1558 = vst.msk [vmem:[%s194 + $0x90] sm:$0xff] %vm1539, %v1512
      %1559 = vst.msk [vmem:[%s194 + $0x98] sm:$0xff] %vm1539, %v1514
      %1560 = vst.msk [vmem:[%s194 + $0xa0] sm:$0xff] %vm1539, %v1516
      %1561 = vst.msk [vmem:[%s194 + $0xa8] sm:$0xff] %vm1539, %v1518
      %1562 = vst.msk [vmem:[%s194 + $0xb0] sm:$0xff] %vm1539, %v1520
      %1563 = vst.msk [vmem:[%s194 + $0xb8] sm:$0xff] %vm1539, %v1522
      %1564 = vst.msk [vmem:[%s194 + $0xc0] sm:$0xff] %vm1539, %v1524
      %1565 = vst.msk [vmem:[%s194 + $0xc8] sm:$0xff] %vm1539, %v1526
      %1566 = vst.msk [vmem:[%s194 + $0xd0] sm:$0xff] %vm1539, %v1528
      %1567 = vst.msk [vmem:[%s194 + $0xd8] sm:$0xff] %vm1539, %v1530
      %1568 = vst.msk [vmem:[%s194 + $0xe0] sm:$0xff] %vm1539, %v1532
      %1569 = vst.msk [vmem:[%s194 + $0xe8] sm:$0xff] %vm1539, %v1534
      %1570 = vst.msk [vmem:[%s194 + $0xf0] sm:$0xff] %vm1539, %v1536
      %1571 = vst.msk [vmem:[%s194 + $0xf8] sm:$0xff] %vm1539, %v1538
      %s1572 = smul.u32 32, %s14
      %p1573 = scmp.lt.s32.totalorder %s1572, 63
      %s1574 = scalar_select %p1573, %s1572, 63
      %s1575 = smul.addr %s1574, 8
      %s1576 = scalar_lea.vmem %s3, %s1575
      // Predicated region
      $region33: #{tpu_custom_call.1} parent=31 // pred_check
        %p1577 = pneg %p105
      $region34: #{tpu_custom_call.1} parent=31 // pred_check_branch
        %1579 = sbr.rel (%p1577) target = $region36
      $region35: #{tpu_custom_call.1} parent=31 // pred_region
        %s1580 = smul.u32 32, %s14
      $region36: #{tpu_custom_call.1} parent=31 // pred_fallthru
        _
    $region32: #{tpu_custom_call.1} parent=5 // pred_fallthru
      _
    %p1581 = scmp.le.s32.totalorder 2, %s9
    // Predicated region
    $region37: #{tpu_custom_call.1} parent=5 // pred_check
      %p1582 = pneg %p1581
    $region38: #{tpu_custom_call.1} parent=5 // pred_check_branch
      %1584 = sbr.rel (%p1582) target = $region40
    $region39: #{tpu_custom_call.1} parent=5 // pred_region
      %s1585 = ssub.s32 %s9, 2
      // Predicated region
      $region41: #{tpu_custom_call.1} parent=39 // pred_check
        %p1586 = pneg %p111
      $region42: #{tpu_custom_call.1} parent=39 // pred_check_branch
        %1588 = sbr.rel (%p1586) target = $region44
      $region43: #{tpu_custom_call.1} parent=39 // pred_region
        %s1589 = smul.u32 32, %s15
        %p1590 = scmp.lt.s32.totalorder %s1589, 63
        %s1591 = scalar_select %p1590, %s1589, 63
        %s1592 = smul.addr %s1591, 8
        %s1593 = scalar_lea.vmem %s3, %s1592
      $region44: #{tpu_custom_call.1} parent=39 // pred_fallthru
        _
    $region40: #{tpu_custom_call.1} parent=5 // pred_fallthru
      _
  $region6: #{tpu_custom_call.1} parent=0 // loop_footer
    %s13 = sadd.s32 1, %s9
  $region7: #{tpu_custom_call.1} parent=0 // loop_footer_branch
    %8 = sbr.rel target = $region3
  $region8: #{tpu_custom_call.1} parent=0 // loop_exit
    _

</llo_original>
